<compile_context>
chip_gen: v6e
topology: v6e:2x2x1
jax: 0.10.0
libtpu: 0.0.40
codegen_flags: <defaults>
</compile_context>

<pallas_src>
import jax
import jax.numpy as jnp
from jax import lax
from jax.experimental import pallas as pl
from jax.experimental.pallas import tpu as pltpu
import numpy as np


def basic_block_pallas(x_nchw, w1, g1, be1, rm1, rv1, w2, g2, be2, rm2, rv2,
                       eps=1e-5, num_grid_blocks=None):
    """x_nchw: (B, C, H, W) f32; conv weights PyTorch OIHW; BN params (C,)."""
    B, C, H, W = x_nchw.shape
    HW = H * W

    if num_grid_blocks is None:
        # 2 blocks feed both v7x TensorCores; 1 fat block minimizes per-step
        # pipeline overhead on single-TC v5e/v6e. Split only when the batch is
        # big enough that each block still amortizes the ~0.35us step cost.
        num_grid_blocks = 2 if (B >= 4 and B % 2 == 0) else 1
    NB = num_grid_blocks
    assert B % NB == 0, "batch must divide evenly into grid blocks"
    Bblk = B // NB
    N = Bblk * HW  # lane (matmul-N) extent per grid step; multiple of 128

    # (B, C, H, W) -> (NB, C, Bblk*HW): group images into per-step lane slabs.
    x = (x_nchw.astype(jnp.float32)
         .reshape(NB, Bblk, C, HW)
         .transpose(0, 2, 1, 3)
         .reshape(NB, C, N))

    def fold(w, g, rm, rv, be):
        s = g / jnp.sqrt(rv + eps)                             # BN scale
        b = (be - rm * s).reshape(C, 1).astype(jnp.float32)    # BN bias
        ws = w * s[:, None, None, None]                        # fold scale (OIHW)
        # OIHW -> (O, KH, KW, I) -> (C, 9C); column = kh*3C + kw*C + cin,
        # matching the kernel's [up | base | down] x [left | center | right]
        # channel-concatenated patch rows.
        wt = jnp.transpose(ws, (0, 2, 3, 1)).reshape(C, 9 * C).astype(jnp.bfloat16)
        return wt, b

    w1t, b1 = fold(w1, g1, rm1, rv1, be1)
    w2t, b2 = fold(w2, g2, rm2, rv2, be2)
    w_all = jnp.stack([w1t, w2t])          # (2, C, 9C) bf16
    b_all = jnp.stack([b1, b2])            # (2, C, 1)  f32

    def kernel(x_ref, w_ref, b_ref, o_ref):
        x32 = x_ref[0]                                          # (C, N) f32

        # Per-position validity masks (hoisted; shared by both convs).
        # p is the flattened column over Bblk concatenated images; masks use
        # p % HW / p % W so lane rolls never leak across image boundaries.
        p = lax.broadcasted_iota(jnp.int32, (1, N), 1)
        jpos = p % W
        ipos = p % HW
        mj0 = jpos != 0            # tap (.., j-1) in-bounds
        mj2 = jpos != W - 1        # tap (.., j+1) in-bounds
        mi0 = ipos >= W            # tap (i-1, ..) in-bounds
        mi2 = ipos < HW - W        # tap (i+1, ..) in-bounds

        def conv3x3(v32, w):
            # v32: (C, N) f32; w: (C, 9C) bf16  ->  (C, N) f32
            zc = jnp.zeros_like(v32)
            left = jnp.where(mj0, pltpu.roll(v32, shift=1, axis=1), zc)       # x[:, j-1]
            right = jnp.where(mj2, pltpu.roll(v32, shift=N - 1, axis=1), zc)  # x[:, j+1]
            base = jnp.concatenate([left, v32, right], axis=0)                # (3C, N) kh=1
            zb = jnp.zeros_like(base)
            up = jnp.where(mi0, pltpu.roll(base, shift=W, axis=1), zb)        # kh=0 (row i-1)
            down = jnp.where(mi2, pltpu.roll(base, shift=N - W, axis=1), zb)  # kh=2 (row i+1)
            # All edge masking done pre-matmul (in f32); single bf16 cast.
            patch = jnp.concatenate([up, base, down], axis=0).astype(jnp.bfloat16)  # (9C, N)
            return jnp.dot(w, patch, preferred_element_type=jnp.float32)

        h1 = jnp.maximum(conv3x3(x32, w_ref[0]) + b_ref[0], 0.0)   # conv1+bn1+relu
        h2 = conv3x3(h1, w_ref[1]) + b_ref[1]                      # conv2+bn2
        o_ref[0] = jnp.maximum(h2 + x32, 0.0).astype(o_ref.dtype)  # + identity, relu

    flops = 4 * C * (9 * C) * B * HW          # 2 convs x 2*C*9C*(B*HW) MACs
    bytes_accessed = 2 * B * C * HW * 4 + 2 * C * 9 * C * 2 + 2 * C * 4

    out = pl.pallas_call(
        kernel,
        out_shape=jax.ShapeDtypeStruct((NB, C, N), jnp.float32),
        grid_spec=pltpu.PrefetchScalarGridSpec(
            num_scalar_prefetch=0,
            grid=(NB,),
            in_specs=[
                pl.BlockSpec((1, C, N), lambda i: (i, 0, 0)),
                pl.BlockSpec((2, C, 9 * C), lambda i: (0, 0, 0)),
                pl.BlockSpec((2, C, 1), lambda i: (0, 0, 0)),
            ],
            out_specs=pl.BlockSpec((1, C, N), lambda i: (i, 0, 0)),
        ),
        compiler_params=pltpu.CompilerParams(
            dimension_semantics=("parallel",)),
        cost_estimate=pl.CostEstimate(flops=flops, transcendentals=0,
                                      bytes_accessed=bytes_accessed),
    )(x, w_all, b_all)

    # (NB, C, Bblk*HW) -> (B, C, H, W)
    return (out.reshape(NB, C, Bblk, HW)
               .transpose(0, 2, 1, 3)
               .reshape(B, C, H, W))


def basic_block_ref(x_nchw, w1, g1, be1, rm1, rv1, w2, g2, be2, rm2, rv2,
                    eps=1e-5):
    """Pure-JAX f32 reference (NHWC convs), same math as the PyTorch module."""
    x = jnp.transpose(x_nchw, (0, 2, 3, 1))
    w1k = jnp.transpose(w1, (2, 3, 1, 0))
    w2k = jnp.transpose(w2, (2, 3, 1, 0))
    dn = lax.conv_dimension_numbers(x.shape, w1k.shape, ("NHWC", "HWIO", "NHWC"))

    def bn(h, g, be, rm, rv):
        return (h - rm) * (g / jnp.sqrt(rv + eps)) + be

    h = lax.conv_general_dilated(x, w1k, (1, 1), "SAME", dimension_numbers=dn)
    h = jnp.maximum(bn(h, g1, be1, rm1, rv1), 0.0)
    h = lax.conv_general_dilated(h, w2k, (1, 1), "SAME", dimension_numbers=dn)
    h = bn(h, g2, be2, rm2, rv2) + x
    h = jnp.maximum(h, 0.0)
    return jnp.transpose(h, (0, 3, 1, 2))


if __name__ == "__main__":
    B, C, H, W = 2, 32, 16, 16          # inplanes == planes, stride=1, no downsample
    key = jax.random.PRNGKey(0)
    ks = jax.random.split(key, 11)

    x = jax.random.normal(ks[0], (B, C, H, W), jnp.float32)

    w1 = 0.05 * jax.random.normal(ks[1], (C, C, 3, 3), jnp.float32)   # OIHW
    w2 = 0.05 * jax.random.normal(ks[2], (C, C, 3, 3), jnp.float32)
    g1 = 1.0 + 0.1 * jax.random.normal(ks[3], (C,), jnp.float32)
    be1 = 0.1 * jax.random.normal(ks[4], (C,), jnp.float32)
    rm1 = 0.1 * jax.random.normal(ks[5], (C,), jnp.float32)
    rv1 = 0.5 + jax.random.uniform(ks[6], (C,), jnp.float32)
    g2 = 1.0 + 0.1 * jax.random.normal(ks[7], (C,), jnp.float32)
    be2 = 0.1 * jax.random.normal(ks[8], (C,), jnp.float32)
    rm2 = 0.1 * jax.random.normal(ks[9], (C,), jnp.float32)
    rv2 = 0.5 + jax.random.uniform(ks[10], (C,), jnp.float32)

    out = basic_block_pallas(x, w1, g1, be1, rm1, rv1, w2, g2, be2, rm2, rv2)
    out = jax.block_until_ready(out)

    ref = basic_block_ref(x, w1, g1, be1, rm1, rv1, w2, g2, be2, rm2, rv2)
    ref = jax.block_until_ready(ref)

    assert out.shape == (B, C, H, W)
    # bf16 MXU operands (f32 accumulate): tolerance covers the bf16 rounding.
    np.testing.assert_allclose(np.asarray(out), np.asarray(ref),
                               rtol=2e-2, atol=2e-2)
    print("KERNEL_OK")
</pallas_src>

<mosaic_0001>
module attributes {stable_mosaic.version = 11 : i64} {
  func.func @kernel(%arg0: i32, %arg1: memref<1x32x512xf32, #tpu.memory_space<vmem>>, %arg2: memref<2x32x288xbf16, #tpu.memory_space<vmem>>, %arg3: memref<2x32x1xf32, #tpu.memory_space<vmem>>, %arg4: memref<1x32x512xf32, #tpu.memory_space<vmem>>) attributes {dimension_semantics = [#tpu.dimension_semantics<parallel>], iteration_bounds = array<i64: 1>, scalar_prefetch = 0 : i64, scratch_operands = 0 : i64, tpu.core_type = #tpu.core_type<tc>, window_params = [{transform_indices = @transform_0, window_bounds = array<i64: 1, 32, 512>}, {pipeline_mode = #tpu.pipeline_mode<synchronous>, transform_indices = @transform_1, window_bounds = array<i64: 2, 32, 288>}, {pipeline_mode = #tpu.pipeline_mode<synchronous>, transform_indices = @transform_2, window_bounds = array<i64: 2, 32, 1>}, {transform_indices = @transform_3, window_bounds = array<i64: 1, 32, 512>}]} {
    %c0 = arith.constant 0 : index
    %c0_0 = arith.constant 0 : index
    %c0_1 = arith.constant 0 : index
    %0 = vector.load %arg1[%c0, %c0_0, %c0_1] : memref<1x32x512xf32, #tpu.memory_space<vmem>>, vector<1x32x512xf32>
    %1 = vector.shape_cast %0 : vector<1x32x512xf32> to vector<32x512xf32>
    %2 = tpu.iota {dimensions = array<i32: 1>} : vector<1x512xi32>
    %c16_i32 = arith.constant 16 : i32
    %c0_i32 = arith.constant 0 : i32
    %3 = arith.cmpi eq, %c16_i32, %c0_i32 : i32
    %c1_i32 = arith.constant 1 : i32
    %4 = arith.select %3, %c1_i32, %c16_i32 : i32
    %5 = vector.broadcast %4 : i32 to vector<1x512xi32>
    %6 = arith.remsi %2, %5 : vector<1x512xi32>
    %c0_i32_2 = arith.constant 0 : i32
    %7 = vector.broadcast %c0_i32_2 : i32 to vector<1x512xi32>
    %8 = arith.cmpi ne, %6, %7 : vector<1x512xi32>
    %c0_i32_3 = arith.constant 0 : i32
    %9 = vector.broadcast %c0_i32_3 : i32 to vector<1x512xi32>
    %10 = arith.cmpi slt, %6, %9 : vector<1x512xi32>
    %c0_i32_4 = arith.constant 0 : i32
    %11 = arith.cmpi slt, %4, %c0_i32_4 : i32
    %12 = vector.broadcast %11 : i1 to vector<1x512xi1>
    %13 = vector.broadcast %12 : vector<1x512xi1> to vector<1x512xi1>
    %14 = arith.xori %10, %13 : vector<1x512xi1>
    %15 = arith.andi %14, %8 : vector<1x512xi1>
    %16 = vector.broadcast %4 : i32 to vector<1x512xi32>
    %17 = arith.addi %6, %16 : vector<1x512xi32>
    %18 = arith.select %15, %17, %6 : vector<1x512xi1>, vector<1x512xi32>
    %c256_i32 = arith.constant 256 : i32
    %c0_i32_5 = arith.constant 0 : i32
    %19 = arith.cmpi eq, %c256_i32, %c0_i32_5 : i32
    %c1_i32_6 = arith.constant 1 : i32
    %20 = arith.select %19, %c1_i32_6, %c256_i32 : i32
    %21 = vector.broadcast %20 : i32 to vector<1x512xi32>
    %22 = arith.remsi %2, %21 : vector<1x512xi32>
    %c0_i32_7 = arith.constant 0 : i32
    %23 = vector.broadcast %c0_i32_7 : i32 to vector<1x512xi32>
    %24 = arith.cmpi ne, %22, %23 : vector<1x512xi32>
    %c0_i32_8 = arith.constant 0 : i32
    %25 = vector.broadcast %c0_i32_8 : i32 to vector<1x512xi32>
    %26 = arith.cmpi slt, %22, %25 : vector<1x512xi32>
    %c0_i32_9 = arith.constant 0 : i32
    %27 = arith.cmpi slt, %20, %c0_i32_9 : i32
    %28 = vector.broadcast %27 : i1 to vector<1x512xi1>
    %29 = vector.broadcast %28 : vector<1x512xi1> to vector<1x512xi1>
    %30 = arith.xori %26, %29 : vector<1x512xi1>
    %31 = arith.andi %30, %24 : vector<1x512xi1>
    %32 = vector.broadcast %20 : i32 to vector<1x512xi32>
    %33 = arith.addi %22, %32 : vector<1x512xi32>
    %34 = arith.select %31, %33, %22 : vector<1x512xi1>, vector<1x512xi32>
    %c0_i32_10 = arith.constant 0 : i32
    %35 = vector.broadcast %c0_i32_10 : i32 to vector<1x512xi32>
    %36 = arith.cmpi ne, %18, %35 : vector<1x512xi32>
    %c15_i32 = arith.constant 15 : i32
    %37 = vector.broadcast %c15_i32 : i32 to vector<1x512xi32>
    %38 = arith.cmpi ne, %18, %37 : vector<1x512xi32>
    %c16_i32_11 = arith.constant 16 : i32
    %39 = vector.broadcast %c16_i32_11 : i32 to vector<1x512xi32>
    %40 = arith.cmpi sge, %34, %39 : vector<1x512xi32>
    %c240_i32 = arith.constant 240 : i32
    %41 = vector.broadcast %c240_i32 : i32 to vector<1x512xi32>
    %42 = arith.cmpi slt, %34, %41 : vector<1x512xi32>
    %c0_12 = arith.constant 0 : index
    %c0_13 = arith.constant 0 : index
    %c0_14 = arith.constant 0 : index
    %43 = vector.load %arg2[%c0_12, %c0_13, %c0_14] : memref<2x32x288xbf16, #tpu.memory_space<vmem>>, vector<1x32x288xbf16>
    %44 = vector.shape_cast %43 : vector<1x32x288xbf16> to vector<32x288xbf16>
    %cst = arith.constant 0.000000e+00 : f32
    %45 = vector.broadcast %cst : f32 to vector<32x512xf32>
    %c1_i32_15 = arith.constant 1 : i32
    %46 = tpu.dynamic_rotate %1 by %c1_i32_15 dim 1 : vector<32x512xf32>, i32 -> vector<32x512xf32>
    %47 = vector.shape_cast %36 : vector<1x512xi1> to vector<1x512xi1>
    %48 = vector.broadcast %47 : vector<1x512xi1> to vector<32x512xi1>
    %49 = arith.select %48, %46, %45 : vector<32x512xi1>, vector<32x512xf32>
    %c511_i32 = arith.constant 511 : i32
    %50 = tpu.dynamic_rotate %1 by %c511_i32 dim 1 : vector<32x512xf32>, i32 -> vector<32x512xf32>
    %51 = vector.shape_cast %38 : vector<1x512xi1> to vector<1x512xi1>
    %52 = vector.broadcast %51 : vector<1x512xi1> to vector<32x512xi1>
    %53 = arith.select %52, %50, %45 : vector<32x512xi1>, vector<32x512xf32>
    %54 = tpu.concatenate %49, %1, %53 in 0 : vector<32x512xf32>, vector<32x512xf32>, vector<32x512xf32> -> vector<96x512xf32>
    %cst_16 = arith.constant 0.000000e+00 : f32
    %55 = vector.broadcast %cst_16 : f32 to vector<96x512xf32>
    %c16_i32_17 = arith.constant 16 : i32
    %56 = tpu.dynamic_rotate %54 by %c16_i32_17 dim 1 : vector<96x512xf32>, i32 -> vector<96x512xf32>
    %57 = vector.shape_cast %40 : vector<1x512xi1> to vector<1x512xi1>
    %58 = vector.broadcast %57 : vector<1x512xi1> to vector<96x512xi1>
    %59 = arith.select %58, %56, %55 : vector<96x512xi1>, vector<96x512xf32>
    %c496_i32 = arith.constant 496 : i32
    %60 = tpu.dynamic_rotate %54 by %c496_i32 dim 1 : vector<96x512xf32>, i32 -> vector<96x512xf32>
    %61 = vector.shape_cast %42 : vector<1x512xi1> to vector<1x512xi1>
    %62 = vector.broadcast %61 : vector<1x512xi1> to vector<96x512xi1>
    %63 = arith.select %62, %60, %55 : vector<96x512xi1>, vector<96x512xf32>
    %64 = tpu.concatenate %59, %54, %63 in 0 : vector<96x512xf32>, vector<96x512xf32>, vector<96x512xf32> -> vector<288x512xf32>
    %65 = arith.truncf %64 : vector<288x512xf32> to vector<288x512xbf16>
    %cst_18 = arith.constant dense<0.000000e+00> : vector<32x512xf32>
    %66 = tpu.matmul %44, %65, %cst_18 {dimension_numbers = #tpu.dot_dimension_numbers<[1], [0], [0], [1], [0, 0, 1, 1], [], []>} : vector<32x288xbf16>, vector<288x512xbf16>, vector<32x512xf32> -> vector<32x512xf32>
    %c0_19 = arith.constant 0 : index
    %c0_20 = arith.constant 0 : index
    %c0_21 = arith.constant 0 : index
    %67 = vector.load %arg3[%c0_19, %c0_20, %c0_21] : memref<2x32x1xf32, #tpu.memory_space<vmem>>, vector<1x32x1xf32>
    %68 = vector.shape_cast %67 : vector<1x32x1xf32> to vector<32x1xf32>
    %69 = vector.broadcast %68 : vector<32x1xf32> to vector<32x512xf32>
    %70 = arith.addf %66, %69 : vector<32x512xf32>
    %cst_22 = arith.constant 0.000000e+00 : f32
    %71 = vector.broadcast %cst_22 : f32 to vector<32x512xf32>
    %72 = arith.maximumf %70, %71 : vector<32x512xf32>
    %c1 = arith.constant 1 : index
    %c0_23 = arith.constant 0 : index
    %c0_24 = arith.constant 0 : index
    %73 = vector.load %arg2[%c1, %c0_23, %c0_24] : memref<2x32x288xbf16, #tpu.memory_space<vmem>>, vector<1x32x288xbf16>
    %74 = vector.shape_cast %73 : vector<1x32x288xbf16> to vector<32x288xbf16>
    %cst_25 = arith.constant 0.000000e+00 : f32
    %75 = vector.broadcast %cst_25 : f32 to vector<32x512xf32>
    %c1_i32_26 = arith.constant 1 : i32
    %76 = tpu.dynamic_rotate %72 by %c1_i32_26 dim 1 : vector<32x512xf32>, i32 -> vector<32x512xf32>
    %77 = vector.shape_cast %36 : vector<1x512xi1> to vector<1x512xi1>
    %78 = vector.broadcast %77 : vector<1x512xi1> to vector<32x512xi1>
    %79 = arith.select %78, %76, %75 : vector<32x512xi1>, vector<32x512xf32>
    %c511_i32_27 = arith.constant 511 : i32
    %80 = tpu.dynamic_rotate %72 by %c511_i32_27 dim 1 : vector<32x512xf32>, i32 -> vector<32x512xf32>
    %81 = vector.shape_cast %38 : vector<1x512xi1> to vector<1x512xi1>
    %82 = vector.broadcast %81 : vector<1x512xi1> to vector<32x512xi1>
    %83 = arith.select %82, %80, %75 : vector<32x512xi1>, vector<32x512xf32>
    %84 = tpu.concatenate %79, %72, %83 in 0 : vector<32x512xf32>, vector<32x512xf32>, vector<32x512xf32> -> vector<96x512xf32>
    %cst_28 = arith.constant 0.000000e+00 : f32
    %85 = vector.broadcast %cst_28 : f32 to vector<96x512xf32>
    %c16_i32_29 = arith.constant 16 : i32
    %86 = tpu.dynamic_rotate %84 by %c16_i32_29 dim 1 : vector<96x512xf32>, i32 -> vector<96x512xf32>
    %87 = vector.shape_cast %40 : vector<1x512xi1> to vector<1x512xi1>
    %88 = vector.broadcast %87 : vector<1x512xi1> to vector<96x512xi1>
    %89 = arith.select %88, %86, %85 : vector<96x512xi1>, vector<96x512xf32>
    %c496_i32_30 = arith.constant 496 : i32
    %90 = tpu.dynamic_rotate %84 by %c496_i32_30 dim 1 : vector<96x512xf32>, i32 -> vector<96x512xf32>
    %91 = vector.shape_cast %42 : vector<1x512xi1> to vector<1x512xi1>
    %92 = vector.broadcast %91 : vector<1x512xi1> to vector<96x512xi1>
    %93 = arith.select %92, %90, %85 : vector<96x512xi1>, vector<96x512xf32>
    %94 = tpu.concatenate %89, %84, %93 in 0 : vector<96x512xf32>, vector<96x512xf32>, vector<96x512xf32> -> vector<288x512xf32>
    %95 = arith.truncf %94 : vector<288x512xf32> to vector<288x512xbf16>
    %cst_31 = arith.constant dense<0.000000e+00> : vector<32x512xf32>
    %96 = tpu.matmul %74, %95, %cst_31 {dimension_numbers = #tpu.dot_dimension_numbers<[1], [0], [0], [1], [0, 0, 1, 1], [], []>} : vector<32x288xbf16>, vector<288x512xbf16>, vector<32x512xf32> -> vector<32x512xf32>
    %c1_32 = arith.constant 1 : index
    %c0_33 = arith.constant 0 : index
    %c0_34 = arith.constant 0 : index
    %97 = vector.load %arg3[%c1_32, %c0_33, %c0_34] : memref<2x32x1xf32, #tpu.memory_space<vmem>>, vector<1x32x1xf32>
    %98 = vector.shape_cast %97 : vector<1x32x1xf32> to vector<32x1xf32>
    %99 = vector.broadcast %98 : vector<32x1xf32> to vector<32x512xf32>
    %100 = arith.addf %96, %99 : vector<32x512xf32>
    %101 = arith.addf %100, %1 : vector<32x512xf32>
    %cst_35 = arith.constant 0.000000e+00 : f32
    %102 = vector.broadcast %cst_35 : f32 to vector<32x512xf32>
    %103 = arith.maximumf %101, %102 : vector<32x512xf32>
    %c0_36 = arith.constant 0 : index
    %c0_37 = arith.constant 0 : index
    %c0_38 = arith.constant 0 : index
    %104 = vector.load %arg4[%c0_36, %c0_37, %c0_38] : memref<1x32x512xf32, #tpu.memory_space<vmem>>, vector<1x32x512xf32>
    %105 = vector.shape_cast %104 : vector<1x32x512xf32> to vector<32x512xf32>
    %106 = vector.shape_cast %103 : vector<32x512xf32> to vector<1x32x512xf32>
    tpu.vector_store %arg4[%c0_36, %c0_37, %c0_38], %106 {strides = array<i32>} : memref<1x32x512xf32, #tpu.memory_space<vmem>>, vector<1x32x512xf32>,
    return
  }
  func.func @transform_0(%arg0: i32) -> (i32, i32, i32) {
    %c0_i32 = arith.constant 0 : i32
    %c0_i32_0 = arith.constant 0 : i32
    %c0_i32_1 = arith.constant 0 : i32
    return %arg0, %c0_i32, %c0_i32_0 : i32, i32, i32
  }
  func.func @transform_1(%arg0: i32) -> (i32, i32, i32) {
    %c0_i32 = arith.constant 0 : i32
    %c0_i32_0 = arith.constant 0 : i32
    %c0_i32_1 = arith.constant 0 : i32
    %c0_i32_2 = arith.constant 0 : i32
    return %c0_i32, %c0_i32_0, %c0_i32_1 : i32, i32, i32
  }
  func.func @transform_2(%arg0: i32) -> (i32, i32, i32) {
    %c0_i32 = arith.constant 0 : i32
    %c0_i32_0 = arith.constant 0 : i32
    %c0_i32_1 = arith.constant 0 : i32
    %c0_i32_2 = arith.constant 0 : i32
    return %c0_i32, %c0_i32_0, %c0_i32_1 : i32, i32, i32
  }
  func.func @transform_3(%arg0: i32) -> (i32, i32, i32) {
    %c0_i32 = arith.constant 0 : i32
    %c0_i32_0 = arith.constant 0 : i32
    %c0_i32_1 = arith.constant 0 : i32
    return %arg0, %c0_i32, %c0_i32_0 : i32, i32, i32
  }
}

</mosaic_0001>

<llo_original>
// kernel: tpu_custom_call.1
$region0: #{tpu_custom_call.1}
  #allocation0 [shape = 'u32[]', space=smem, size = 0x4, offset = 0x4, fixed_abs, tag = 'smem constant byte address 0x4 - core index']
  #allocation1 [shape = 'u32[144,128]{1,0:T(1,128)}', space=vmem, size = 0x12000, scoped, tag = 'internal scratch']
  %s0 = inlined_call_operand.hbm [shape: f32[1,32,512], index: 0, kind: input, shape index: {}]
  %s1 = inlined_call_operand.hbm [shape: bf16[2,32,288], index: 1, kind: input, shape index: {}]
  %s2 = inlined_call_operand.vmem [shape: f32[2,32,1], index: 2, kind: input, shape index: {}]
  %s3 = inlined_call_operand.hbm [shape: f32[1,32,512], index: 3, kind: output, shape index: {}]
  %s4 = sld [smem:[#allocation0]]
  $region30: #{tpu_custom_call.1} parent=0
    _
  %s6 = ssub.s32 1, %s4
  %s7 = scalar_select 0, %s6, %s4
  $region1: #{tpu_custom_call.1} parent=0
    #allocation2 [shape = 'u8[65536]{0}', space=vmem, size = 0x10000, scoped, tag = 'input window, operand 0, single buffered']
    #allocation3 [shape = 's32[1]{0}', space=sflag, size = 0x4, scoped, tag = 'scoped memory for tpu_custom_call.1']
    #allocation4 [shape = 's32[1]{0}', space=sflag, size = 0x4, scoped, tag = 'scoped memory for tpu_custom_call.1']
    #allocation5 [shape = 'u8[49152]{0}', space=vmem, size = 0xc000, scoped, tag = 'input window, operand 1, single buffered']
    #allocation6 [shape = 's32[1]{0}', space=sflag, size = 0x4, scoped, tag = 'scoped memory for tpu_custom_call.1']
    #allocation7 [shape = 'u8[65536]{0}', space=vmem, size = 0x10000, scoped, tag = 'output window, operand 0, single buffered']
    %8 = vsyncpa [#allocation3], 0
    %9 = vsyncpa [#allocation6], 0
    %10 = vsyncpa [#allocation4], 0
    // Predicated region
    $region2: #{tpu_custom_call.1} parent=1 // pred_check
      _
    $region3: #{tpu_custom_call.1} parent=1 // pred_check_branch
      %12 = sbr.rel (0) target = $region5
    $region4: #{tpu_custom_call.1} parent=1 // pred_region
      %s14 = ssub.s32 2048, 2048
      %15 = vsyncadd [#allocation3], %s14
      %s16 = sshll.u32 [#allocation2], 4
      %s17 = int_to_ptr.vmem [resolvable:$true] %s16
      %22 = dma.hbm_to_vmem [thread:$0]  %s0, 2048, %s17, [#allocation3], 512, 512, 32
    $region5: #{tpu_custom_call.1} parent=1 // pred_fallthru
      _
    // Predicated region
    $region6: #{tpu_custom_call.1} parent=1 // pred_check
      _
    $region7: #{tpu_custom_call.1} parent=1 // pred_check_branch
      %24 = sbr.rel (0) target = $region9
    $region8: #{tpu_custom_call.1} parent=1 // pred_region
      %s26 = ssub.s32 1536, 1536
      %27 = vsyncadd [#allocation6], %s26
      %s28 = sshll.u32 [#allocation5], 4
      %s29 = int_to_ptr.vmem [resolvable:$true] %s28
      %34 = dma.hbm_to_vmem [thread:$0]  %s1, 1536, %s29, [#allocation6], 192, 192, 12
    $region9: #{tpu_custom_call.1} parent=1 // pred_fallthru
      _
    // Predicated region
    $region10: #{tpu_custom_call.1} parent=1 // pred_check
      _
    $region11: #{tpu_custom_call.1} parent=1 // pred_check_branch
      %36 = sbr.rel (0) target = $region13
    $region12: #{tpu_custom_call.1} parent=1 // pred_region
      _
    $region13: #{tpu_custom_call.1} parent=1 // pred_fallthru
      _
    // Predicated region
    $region14: #{tpu_custom_call.1} parent=1 // pred_check
      _
    $region15: #{tpu_custom_call.1} parent=1 // pred_check_branch
      %38 = sbr.rel (0) target = $region17
    $region16: #{tpu_custom_call.1} parent=1 // pred_region
      %39 = dma.done [#allocation3], 2048
    $region17: #{tpu_custom_call.1} parent=1 // pred_fallthru
      _
    // Predicated region
    $region18: #{tpu_custom_call.1} parent=1 // pred_check
      _
    $region19: #{tpu_custom_call.1} parent=1 // pred_check_branch
      %41 = sbr.rel (0) target = $region21
    $region20: #{tpu_custom_call.1} parent=1 // pred_region
      %42 = dma.done [#allocation6], 1536
    $region21: #{tpu_custom_call.1} parent=1 // pred_fallthru
      _
    %v44 = vld [vmem:[#allocation2] sm:$0xff]
    %v45 = vld [vmem:[#allocation2 + $0x8] sm:$0xff]
    %v46 = vld [vmem:[#allocation2 + $0x10] sm:$0xff]
    %v47 = vld [vmem:[#allocation2 + $0x18] sm:$0xff]
    %v48 = vld [vmem:[#allocation2 + $0x20] sm:$0xff]
    %v49 = vld [vmem:[#allocation2 + $0x28] sm:$0xff]
    %v50 = vld [vmem:[#allocation2 + $0x30] sm:$0xff]
    %v51 = vld [vmem:[#allocation2 + $0x38] sm:$0xff]
    %v52 = vld [vmem:[#allocation2 + $0x40] sm:$0xff]
    %v53 = vld [vmem:[#allocation2 + $0x48] sm:$0xff]
    %v54 = vld [vmem:[#allocation2 + $0x50] sm:$0xff]
    %v55 = vld [vmem:[#allocation2 + $0x58] sm:$0xff]
    %v56 = vld [vmem:[#allocation2 + $0x60] sm:$0xff]
    %v57 = vld [vmem:[#allocation2 + $0x68] sm:$0xff]
    %v58 = vld [vmem:[#allocation2 + $0x70] sm:$0xff]
    %v59 = vld [vmem:[#allocation2 + $0x78] sm:$0xff]
    %v60 = vlaneseq
    %v61 = vand.u32 %v60, 127
    %v62 = vadd.s32 %v61, 128
    %v63 = vadd.s32 %v61, 256
    %v64 = vadd.s32 %v61, 384
    %vm65 = vcmp.lt.s32.totalorder %v61, 0
    %v66 = vsub.s32 0, %v61
    %v67 = vsel %vm65, %v66, %v61
    %v68 = vshrl.u32 %v67, 4
    %v69 = vand.u32 %v67, 15
    %v70 = vsub.s32 0, %v69
    %v71 = vsel %vm65, %v70, %v69
    %vm72 = vcmp.lt.s32.totalorder %v62, 0
    %v73 = vsub.s32 0, %v62
    %v74 = vsel %vm72, %v73, %v62
    %v75 = vshrl.u32 %v74, 4
    %v76 = vand.u32 %v74, 15
    %v77 = vsub.s32 0, %v76
    %v78 = vsel %vm72, %v77, %v76
    %vm79 = vcmp.lt.s32.totalorder %v63, 0
    %v80 = vsub.s32 0, %v63
    %v81 = vsel %vm79, %v80, %v63
    %v82 = vshrl.u32 %v81, 4
    %v83 = vand.u32 %v81, 15
    %v84 = vsub.s32 0, %v83
    %v85 = vsel %vm79, %v84, %v83
    %vm86 = vcmp.lt.s32.totalorder %v64, 0
    %v87 = vsub.s32 0, %v64
    %v88 = vsel %vm86, %v87, %v64
    %v89 = vshrl.u32 %v88, 4
    %v90 = vand.u32 %v88, 15
    %v91 = vsub.s32 0, %v90
    %v92 = vsel %vm86, %v91, %v90
    %vm93 = vcmp.ne.s32.totalorder %v71, 0
    %vm94 = vcmp.ne.s32.totalorder %v78, 0
    %vm95 = vcmp.ne.s32.totalorder %v85, 0
    %vm96 = vcmp.ne.s32.totalorder %v92, 0
    %vm97 = vcmp.lt.s32.totalorder %v71, 0
    %vm98 = vcmp.lt.s32.totalorder %v78, 0
    %vm99 = vcmp.lt.s32.totalorder %v85, 0
    %vm100 = vcmp.lt.s32.totalorder %v92, 0
    %vm101 = vmand %vm97, %vm93
    %vm102 = vmand %vm98, %vm94
    %vm103 = vmand %vm99, %vm95
    %vm104 = vmand %vm100, %vm96
    %v105 = vadd.s32 %v71, 16
    %v106 = vadd.s32 %v78, 16
    %v107 = vadd.s32 %v85, 16
    %v108 = vadd.s32 %v92, 16
    %v109 = vsel %vm101, %v105, %v71
    %v110 = vsel %vm102, %v106, %v78
    %v111 = vsel %vm103, %v107, %v85
    %v112 = vsel %vm104, %v108, %v92
    %vm113 = vcmp.lt.s32.totalorder %v61, 0
    %v114 = vsub.s32 0, %v61
    %v115 = vsel %vm113, %v114, %v61
    %v116 = vshrl.u32 %v115, 8
    %v117 = vand.u32 %v115, 255
    %v118 = vsub.s32 0, %v117
    %v119 = vsel %vm113, %v118, %v117
    %vm120 = vcmp.lt.s32.totalorder %v62, 0
    %v121 = vsub.s32 0, %v62
    %v122 = vsel %vm120, %v121, %v62
    %v123 = vshrl.u32 %v122, 8
    %v124 = vand.u32 %v122, 255
    %v125 = vsub.s32 0, %v124
    %v126 = vsel %vm120, %v125, %v124
    %vm127 = vcmp.lt.s32.totalorder %v63, 0
    %v128 = vsub.s32 0, %v63
    %v129 = vsel %vm127, %v128, %v63
    %v130 = vshrl.u32 %v129, 8
    %v131 = vand.u32 %v129, 255
    %v132 = vsub.s32 0, %v131
    %v133 = vsel %vm127, %v132, %v131
    %vm134 = vcmp.lt.s32.totalorder %v64, 0
    %v135 = vsub.s32 0, %v64
    %v136 = vsel %vm134, %v135, %v64
    %v137 = vshrl.u32 %v136, 8
    %v138 = vand.u32 %v136, 255
    %v139 = vsub.s32 0, %v138
    %v140 = vsel %vm134, %v139, %v138
    %vm141 = vcmp.ne.s32.totalorder %v119, 0
    %vm142 = vcmp.ne.s32.totalorder %v126, 0
    %vm143 = vcmp.ne.s32.totalorder %v133, 0
    %vm144 = vcmp.ne.s32.totalorder %v140, 0
    %vm145 = vcmp.lt.s32.totalorder %v119, 0
    %vm146 = vcmp.lt.s32.totalorder %v126, 0
    %vm147 = vcmp.lt.s32.totalorder %v133, 0
    %vm148 = vcmp.lt.s32.totalorder %v140, 0
    %vm149 = vmand %vm145, %vm141
    %vm150 = vmand %vm146, %vm142
    %vm151 = vmand %vm147, %vm143
    %vm152 = vmand %vm148, %vm144
    %v153 = vadd.s32 %v119, 256
    %v154 = vadd.s32 %v126, 256
    %v155 = vadd.s32 %v133, 256
    %v156 = vadd.s32 %v140, 256
    %v157 = vsel %vm149, %v153, %v119
    %v158 = vsel %vm150, %v154, %v126
    %v159 = vsel %vm151, %v155, %v133
    %v160 = vsel %vm152, %v156, %v140
    %vm161 = vcmp.ne.s32.totalorder %v109, 0
    %vm162 = vcmp.ne.s32.totalorder %v110, 0
    %vm163 = vcmp.ne.s32.totalorder %v111, 0
    %vm164 = vcmp.ne.s32.totalorder %v112, 0
    %vm165 = vcmp.ne.s32.totalorder %v109, 15
    %vm166 = vcmp.ne.s32.totalorder %v110, 15
    %vm167 = vcmp.ne.s32.totalorder %v111, 15
    %vm168 = vcmp.ne.s32.totalorder %v112, 15
    %vm169 = vcmp.ge.s32.totalorder %v157, 16
    %vm170 = vcmp.ge.s32.totalorder %v158, 16
    %vm171 = vcmp.ge.s32.totalorder %v159, 16
    %vm172 = vcmp.ge.s32.totalorder %v160, 16
    %vm173 = vcmp.lt.s32.totalorder %v157, 240
    %vm174 = vcmp.lt.s32.totalorder %v158, 240
    %vm175 = vcmp.lt.s32.totalorder %v159, 240
    %vm176 = vcmp.lt.s32.totalorder %v160, 240
    %v177 = vld [vmem:[#allocation5] sm:$0xff]
    %v178 = vld [vmem:[#allocation5 + $0x8] sm:$0xf]
    %v179 = vld [vmem:[#allocation5 + $0xc] sm:$0xff]
    %v180 = vld [vmem:[#allocation5 + $0x14] sm:$0xf]
    %v181 = vld [vmem:[#allocation5 + $0x18] sm:$0xff]
    %v182 = vld [vmem:[#allocation5 + $0x20] sm:$0xf]
    %v183 = vld [vmem:[#allocation5 + $0x24] sm:$0xff]
    %v184 = vld [vmem:[#allocation5 + $0x2c] sm:$0xf]
    %185 = vrot.lane.b32.xlu0 %v44, 1
    %v186 = vpop.permute.xlu0 %185
    %187 = vrot.lane.b32.xlu0 %v48, 1
    %v188 = vpop.permute.xlu0 %187
    %189 = vrot.lane.b32.xlu0 %v52, 1
    %v190 = vpop.permute.xlu0 %189
    %191 = vrot.lane.b32.xlu0 %v56, 1
    %v192 = vpop.permute.xlu0 %191
    %193 = vrot.lane.b32.xlu0 %v45, 1
    %v194 = vpop.permute.xlu0 %193
    %195 = vrot.lane.b32.xlu0 %v49, 1
    %v196 = vpop.permute.xlu0 %195
    %197 = vrot.lane.b32.xlu0 %v53, 1
    %v198 = vpop.permute.xlu0 %197
    %199 = vrot.lane.b32.xlu0 %v57, 1
    %v200 = vpop.permute.xlu0 %199
    %201 = vrot.lane.b32.xlu0 %v46, 1
    %v202 = vpop.permute.xlu0 %201
    %203 = vrot.lane.b32.xlu0 %v50, 1
    %v204 = vpop.permute.xlu0 %203
    %205 = vrot.lane.b32.xlu0 %v54, 1
    %v206 = vpop.permute.xlu0 %205
    %207 = vrot.lane.b32.xlu0 %v58, 1
    %v208 = vpop.permute.xlu0 %207
    %209 = vrot.lane.b32.xlu0 %v47, 1
    %v210 = vpop.permute.xlu0 %209
    %211 = vrot.lane.b32.xlu0 %v51, 1
    %v212 = vpop.permute.xlu0 %211
    %213 = vrot.lane.b32.xlu0 %v55, 1
    %v214 = vpop.permute.xlu0 %213
    %215 = vrot.lane.b32.xlu0 %v59, 1
    %v216 = vpop.permute.xlu0 %215
    %vm217 = vcmp.lt.s32.totalorder %v61, 1
    %v218 = vsel %vm217, %v202, %v210
    %v219 = vsel %vm217, %v204, %v212
    %v220 = vsel %vm217, %v206, %v214
    %v221 = vsel %vm217, %v208, %v216
    %v222 = vsel %vm217, %v194, %v202
    %v223 = vsel %vm217, %v196, %v204
    %v224 = vsel %vm217, %v198, %v206
    %v225 = vsel %vm217, %v200, %v208
    %v226 = vsel %vm217, %v186, %v194
    %v227 = vsel %vm217, %v188, %v196
    %v228 = vsel %vm217, %v190, %v198
    %v229 = vsel %vm217, %v192, %v200
    %v230 = vsel %vm217, %v210, %v186
    %v231 = vsel %vm217, %v212, %v188
    %v232 = vsel %vm217, %v214, %v190
    %v233 = vsel %vm217, %v216, %v192
    %v234 = vsel %vm161, 1, 0
    %v235 = vsel %vm162, 1, 0
    %v236 = vsel %vm163, 1, 0
    %v237 = vsel %vm164, 1, 0
    %vm238 = vcmp.eq.s32.totalorder %v234, 1
    %vm239 = vcmp.eq.s32.totalorder %v235, 1
    %vm240 = vcmp.eq.s32.totalorder %v236, 1
    %vm241 = vcmp.eq.s32.totalorder %v237, 1
    %v242 = vsel %vm238, %v230, 0.0
    %v243 = vsel %vm239, %v226, 0.0
    %v244 = vsel %vm240, %v222, 0.0
    %v245 = vsel %vm241, %v218, 0.0
    %v246 = vsel %vm238, %v231, 0.0
    %v247 = vsel %vm239, %v227, 0.0
    %v248 = vsel %vm240, %v223, 0.0
    %v249 = vsel %vm241, %v219, 0.0
    %v250 = vsel %vm238, %v232, 0.0
    %v251 = vsel %vm239, %v228, 0.0
    %v252 = vsel %vm240, %v224, 0.0
    %v253 = vsel %vm241, %v220, 0.0
    %v254 = vsel %vm238, %v233, 0.0
    %v255 = vsel %vm239, %v229, 0.0
    %v256 = vsel %vm240, %v225, 0.0
    %v257 = vsel %vm241, %v221, 0.0
    %258 = vrot.lane.b32.xlu0 %v44, 127
    %v259 = vpop.permute.xlu0 %258
    %260 = vrot.lane.b32.xlu0 %v48, 127
    %v261 = vpop.permute.xlu0 %260
    %262 = vrot.lane.b32.xlu0 %v52, 127
    %v263 = vpop.permute.xlu0 %262
    %264 = vrot.lane.b32.xlu0 %v56, 127
    %v265 = vpop.permute.xlu0 %264
    %266 = vrot.lane.b32.xlu0 %v45, 127
    %v267 = vpop.permute.xlu0 %266
    %268 = vrot.lane.b32.xlu0 %v49, 127
    %v269 = vpop.permute.xlu0 %268
    %270 = vrot.lane.b32.xlu0 %v53, 127
    %v271 = vpop.permute.xlu0 %270
    %272 = vrot.lane.b32.xlu0 %v57, 127
    %v273 = vpop.permute.xlu0 %272
    %274 = vrot.lane.b32.xlu0 %v46, 127
    %v275 = vpop.permute.xlu0 %274
    %276 = vrot.lane.b32.xlu0 %v50, 127
    %v277 = vpop.permute.xlu0 %276
    %278 = vrot.lane.b32.xlu0 %v54, 127
    %v279 = vpop.permute.xlu0 %278
    %280 = vrot.lane.b32.xlu0 %v58, 127
    %v281 = vpop.permute.xlu0 %280
    %282 = vrot.lane.b32.xlu0 %v47, 127
    %v283 = vpop.permute.xlu0 %282
    %284 = vrot.lane.b32.xlu0 %v51, 127
    %v285 = vpop.permute.xlu0 %284
    %286 = vrot.lane.b32.xlu0 %v55, 127
    %v287 = vpop.permute.xlu0 %286
    %288 = vrot.lane.b32.xlu0 %v59, 127
    %v289 = vpop.permute.xlu0 %288
    %vm290 = vcmp.lt.s32.totalorder %v61, 127
    %v291 = vsel %vm290, %v275, %v283
    %v292 = vsel %vm290, %v277, %v285
    %v293 = vsel %vm290, %v279, %v287
    %v294 = vsel %vm290, %v281, %v289
    %v295 = vsel %vm290, %v267, %v275
    %v296 = vsel %vm290, %v269, %v277
    %v297 = vsel %vm290, %v271, %v279
    %v298 = vsel %vm290, %v273, %v281
    %v299 = vsel %vm290, %v259, %v267
    %v300 = vsel %vm290, %v261, %v269
    %v301 = vsel %vm290, %v263, %v271
    %v302 = vsel %vm290, %v265, %v273
    %v303 = vsel %vm290, %v283, %v259
    %v304 = vsel %vm290, %v285, %v261
    %v305 = vsel %vm290, %v287, %v263
    %v306 = vsel %vm290, %v289, %v265
    %v307 = vsel %vm165, 1, 0
    %v308 = vsel %vm166, 1, 0
    %v309 = vsel %vm167, 1, 0
    %v310 = vsel %vm168, 1, 0
    %vm311 = vcmp.eq.s32.totalorder %v307, 1
    %vm312 = vcmp.eq.s32.totalorder %v308, 1
    %vm313 = vcmp.eq.s32.totalorder %v309, 1
    %vm314 = vcmp.eq.s32.totalorder %v310, 1
    %v315 = vsel %vm311, %v299, 0.0
    %v316 = vsel %vm312, %v295, 0.0
    %v317 = vsel %vm313, %v291, 0.0
    %v318 = vsel %vm314, %v303, 0.0
    %v319 = vsel %vm311, %v300, 0.0
    %v320 = vsel %vm312, %v296, 0.0
    %v321 = vsel %vm313, %v292, 0.0
    %v322 = vsel %vm314, %v304, 0.0
    %v323 = vsel %vm311, %v301, 0.0
    %v324 = vsel %vm312, %v297, 0.0
    %v325 = vsel %vm313, %v293, 0.0
    %v326 = vsel %vm314, %v305, 0.0
    %v327 = vsel %vm311, %v302, 0.0
    %v328 = vsel %vm312, %v298, 0.0
    %v329 = vsel %vm313, %v294, 0.0
    %v330 = vsel %vm314, %v306, 0.0
    %331 = vrot.lane.b32.xlu0 %v242, 16
    %v332 = vpop.permute.xlu0 %331
    %333 = vrot.lane.b32.xlu0 %v246, 16
    %v334 = vpop.permute.xlu0 %333
    %335 = vrot.lane.b32.xlu0 %v250, 16
    %v336 = vpop.permute.xlu0 %335
    %337 = vrot.lane.b32.xlu0 %v254, 16
    %v338 = vpop.permute.xlu0 %337
    %339 = vrot.lane.b32.xlu0 %v44, 16
    %v340 = vpop.permute.xlu0 %339
    %341 = vrot.lane.b32.xlu0 %v48, 16
    %v342 = vpop.permute.xlu0 %341
    %343 = vrot.lane.b32.xlu0 %v52, 16
    %v344 = vpop.permute.xlu0 %343
    %345 = vrot.lane.b32.xlu0 %v56, 16
    %v346 = vpop.permute.xlu0 %345
    %347 = vrot.lane.b32.xlu0 %v315, 16
    %v348 = vpop.permute.xlu0 %347
    %349 = vrot.lane.b32.xlu0 %v319, 16
    %v350 = vpop.permute.xlu0 %349
    %351 = vrot.lane.b32.xlu0 %v323, 16
    %v352 = vpop.permute.xlu0 %351
    %353 = vrot.lane.b32.xlu0 %v327, 16
    %v354 = vpop.permute.xlu0 %353
    %355 = vrot.lane.b32.xlu0 %v243, 16
    %v356 = vpop.permute.xlu0 %355
    %357 = vrot.lane.b32.xlu0 %v247, 16
    %v358 = vpop.permute.xlu0 %357
    %359 = vrot.lane.b32.xlu0 %v251, 16
    %v360 = vpop.permute.xlu0 %359
    %361 = vrot.lane.b32.xlu0 %v255, 16
    %v362 = vpop.permute.xlu0 %361
    %363 = vrot.lane.b32.xlu0 %v45, 16
    %v364 = vpop.permute.xlu0 %363
    %365 = vrot.lane.b32.xlu0 %v49, 16
    %v366 = vpop.permute.xlu0 %365
    %367 = vrot.lane.b32.xlu0 %v53, 16
    %v368 = vpop.permute.xlu0 %367
    %369 = vrot.lane.b32.xlu0 %v57, 16
    %v370 = vpop.permute.xlu0 %369
    %371 = vrot.lane.b32.xlu0 %v316, 16
    %v372 = vpop.permute.xlu0 %371
    %373 = vrot.lane.b32.xlu0 %v320, 16
    %v374 = vpop.permute.xlu0 %373
    %375 = vrot.lane.b32.xlu0 %v324, 16
    %v376 = vpop.permute.xlu0 %375
    %377 = vrot.lane.b32.xlu0 %v328, 16
    %v378 = vpop.permute.xlu0 %377
    %379 = vrot.lane.b32.xlu0 %v244, 16
    %v380 = vpop.permute.xlu0 %379
    %381 = vrot.lane.b32.xlu0 %v248, 16
    %v382 = vpop.permute.xlu0 %381
    %383 = vrot.lane.b32.xlu0 %v252, 16
    %v384 = vpop.permute.xlu0 %383
    %385 = vrot.lane.b32.xlu0 %v256, 16
    %v386 = vpop.permute.xlu0 %385
    %387 = vrot.lane.b32.xlu0 %v46, 16
    %v388 = vpop.permute.xlu0 %387
    %389 = vrot.lane.b32.xlu0 %v50, 16
    %v390 = vpop.permute.xlu0 %389
    %391 = vrot.lane.b32.xlu0 %v54, 16
    %v392 = vpop.permute.xlu0 %391
    %393 = vrot.lane.b32.xlu0 %v58, 16
    %v394 = vpop.permute.xlu0 %393
    %395 = vrot.lane.b32.xlu0 %v317, 16
    %v396 = vpop.permute.xlu0 %395
    %397 = vrot.lane.b32.xlu0 %v321, 16
    %v398 = vpop.permute.xlu0 %397
    %399 = vrot.lane.b32.xlu0 %v325, 16
    %v400 = vpop.permute.xlu0 %399
    %401 = vrot.lane.b32.xlu0 %v329, 16
    %v402 = vpop.permute.xlu0 %401
    %403 = vrot.lane.b32.xlu0 %v245, 16
    %v404 = vpop.permute.xlu0 %403
    %405 = vrot.lane.b32.xlu0 %v249, 16
    %v406 = vpop.permute.xlu0 %405
    %407 = vrot.lane.b32.xlu0 %v253, 16
    %v408 = vpop.permute.xlu0 %407
    %409 = vrot.lane.b32.xlu0 %v257, 16
    %v410 = vpop.permute.xlu0 %409
    %411 = vrot.lane.b32.xlu0 %v47, 16
    %v412 = vpop.permute.xlu0 %411
    %413 = vrot.lane.b32.xlu0 %v51, 16
    %v414 = vpop.permute.xlu0 %413
    %415 = vrot.lane.b32.xlu0 %v55, 16
    %v416 = vpop.permute.xlu0 %415
    %417 = vrot.lane.b32.xlu0 %v59, 16
    %v418 = vpop.permute.xlu0 %417
    %419 = vrot.lane.b32.xlu0 %v318, 16
    %v420 = vpop.permute.xlu0 %419
    %421 = vrot.lane.b32.xlu0 %v322, 16
    %v422 = vpop.permute.xlu0 %421
    %423 = vrot.lane.b32.xlu0 %v326, 16
    %v424 = vpop.permute.xlu0 %423
    %425 = vrot.lane.b32.xlu0 %v330, 16
    %v426 = vpop.permute.xlu0 %425
    %vm427 = vcmp.lt.s32.totalorder %v61, 16
    %v428 = vsel %vm427, %v380, %v404
    %v429 = vsel %vm427, %v382, %v406
    %v430 = vsel %vm427, %v384, %v408
    %v431 = vsel %vm427, %v386, %v410
    %v432 = vsel %vm427, %v388, %v412
    %v433 = vsel %vm427, %v390, %v414
    %v434 = vsel %vm427, %v392, %v416
    %v435 = vsel %vm427, %v394, %v418
    %v436 = vsel %vm427, %v396, %v420
    %v437 = vsel %vm427, %v398, %v422
    %v438 = vsel %vm427, %v400, %v424
    %v439 = vsel %vm427, %v402, %v426
    %v440 = vsel %vm427, %v356, %v380
    %v441 = vsel %vm427, %v358, %v382
    %v442 = vsel %vm427, %v360, %v384
    %v443 = vsel %vm427, %v362, %v386
    %v444 = vsel %vm427, %v364, %v388
    %v445 = vsel %vm427, %v366, %v390
    %v446 = vsel %vm427, %v368, %v392
    %v447 = vsel %vm427, %v370, %v394
    %v448 = vsel %vm427, %v372, %v396
    %v449 = vsel %vm427, %v374, %v398
    %v450 = vsel %vm427, %v376, %v400
    %v451 = vsel %vm427, %v378, %v402
    %v452 = vsel %vm427, %v332, %v356
    %v453 = vsel %vm427, %v334, %v358
    %v454 = vsel %vm427, %v336, %v360
    %v455 = vsel %vm427, %v338, %v362
    %v456 = vsel %vm427, %v340, %v364
    %v457 = vsel %vm427, %v342, %v366
    %v458 = vsel %vm427, %v344, %v368
    %v459 = vsel %vm427, %v346, %v370
    %v460 = vsel %vm427, %v348, %v372
    %v461 = vsel %vm427, %v350, %v374
    %v462 = vsel %vm427, %v352, %v376
    %v463 = vsel %vm427, %v354, %v378
    %v464 = vsel %vm427, %v404, %v332
    %v465 = vsel %vm427, %v406, %v334
    %v466 = vsel %vm427, %v408, %v336
    %v467 = vsel %vm427, %v410, %v338
    %v468 = vsel %vm427, %v412, %v340
    %v469 = vsel %vm427, %v414, %v342
    %v470 = vsel %vm427, %v416, %v344
    %v471 = vsel %vm427, %v418, %v346
    %v472 = vsel %vm427, %v420, %v348
    %v473 = vsel %vm427, %v422, %v350
    %v474 = vsel %vm427, %v424, %v352
    %v475 = vsel %vm427, %v426, %v354
    %v476 = vsel %vm169, 1, 0
    %v477 = vsel %vm170, 1, 0
    %v478 = vsel %vm171, 1, 0
    %v479 = vsel %vm172, 1, 0
    %vm480 = vcmp.eq.s32.totalorder %v476, 1
    %vm481 = vcmp.eq.s32.totalorder %v477, 1
    %vm482 = vcmp.eq.s32.totalorder %v478, 1
    %vm483 = vcmp.eq.s32.totalorder %v479, 1
    %v484 = vsel %vm480, %v464, 0.0
    %v485 = vsel %vm481, %v452, 0.0
    %v486 = vsel %vm482, %v440, 0.0
    %v487 = vsel %vm483, %v428, 0.0
    %v488 = vsel %vm480, %v465, 0.0
    %v489 = vsel %vm481, %v453, 0.0
    %v490 = vsel %vm482, %v441, 0.0
    %v491 = vsel %vm483, %v429, 0.0
    %v492 = vsel %vm480, %v466, 0.0
    %v493 = vsel %vm481, %v454, 0.0
    %v494 = vsel %vm482, %v442, 0.0
    %v495 = vsel %vm483, %v430, 0.0
    %v496 = vsel %vm480, %v467, 0.0
    %v497 = vsel %vm481, %v455, 0.0
    %v498 = vsel %vm482, %v443, 0.0
    %v499 = vsel %vm483, %v431, 0.0
    %v500 = vsel %vm480, %v468, 0.0
    %v501 = vsel %vm481, %v456, 0.0
    %v502 = vsel %vm482, %v444, 0.0
    %v503 = vsel %vm483, %v432, 0.0
    %v504 = vsel %vm480, %v469, 0.0
    %v505 = vsel %vm481, %v457, 0.0
    %v506 = vsel %vm482, %v445, 0.0
    %v507 = vsel %vm483, %v433, 0.0
    %v508 = vsel %vm480, %v470, 0.0
    %v509 = vsel %vm481, %v458, 0.0
    %v510 = vsel %vm482, %v446, 0.0
    %v511 = vsel %vm483, %v434, 0.0
    %v512 = vsel %vm480, %v471, 0.0
    %v513 = vsel %vm481, %v459, 0.0
    %v514 = vsel %vm482, %v447, 0.0
    %v515 = vsel %vm483, %v435, 0.0
    %v516 = vsel %vm480, %v472, 0.0
    %v517 = vsel %vm481, %v460, 0.0
    %v518 = vsel %vm482, %v448, 0.0
    %v519 = vsel %vm483, %v436, 0.0
    %v520 = vsel %vm480, %v473, 0.0
    %v521 = vsel %vm481, %v461, 0.0
    %v522 = vsel %vm482, %v449, 0.0
    %v523 = vsel %vm483, %v437, 0.0
    %v524 = vsel %vm480, %v474, 0.0
    %v525 = vsel %vm481, %v462, 0.0
    %v526 = vsel %vm482, %v450, 0.0
    %v527 = vsel %vm483, %v438, 0.0
    %v528 = vsel %vm480, %v475, 0.0
    %v529 = vsel %vm481, %v463, 0.0
    %v530 = vsel %vm482, %v451, 0.0
    %v531 = vsel %vm483, %v439, 0.0
    %532 = vrot.lane.b32.xlu0 %v242, 112
    %v533 = vpop.permute.xlu0 %532
    %534 = vrot.lane.b32.xlu0 %v246, 112
    %v535 = vpop.permute.xlu0 %534
    %536 = vrot.lane.b32.xlu0 %v250, 112
    %v537 = vpop.permute.xlu0 %536
    %538 = vrot.lane.b32.xlu0 %v254, 112
    %v539 = vpop.permute.xlu0 %538
    %540 = vrot.lane.b32.xlu0 %v44, 112
    %v541 = vpop.permute.xlu0 %540
    %542 = vrot.lane.b32.xlu0 %v48, 112
    %v543 = vpop.permute.xlu0 %542
    %544 = vrot.lane.b32.xlu0 %v52, 112
    %v545 = vpop.permute.xlu0 %544
    %546 = vrot.lane.b32.xlu0 %v56, 112
    %v547 = vpop.permute.xlu0 %546
    %548 = vrot.lane.b32.xlu0 %v315, 112
    %v549 = vpop.permute.xlu0 %548
    %550 = vrot.lane.b32.xlu0 %v319, 112
    %v551 = vpop.permute.xlu0 %550
    %552 = vrot.lane.b32.xlu0 %v323, 112
    %v553 = vpop.permute.xlu0 %552
    %554 = vrot.lane.b32.xlu0 %v327, 112
    %v555 = vpop.permute.xlu0 %554
    %556 = vrot.lane.b32.xlu0 %v243, 112
    %v557 = vpop.permute.xlu0 %556
    %558 = vrot.lane.b32.xlu0 %v247, 112
    %v559 = vpop.permute.xlu0 %558
    %560 = vrot.lane.b32.xlu0 %v251, 112
    %v561 = vpop.permute.xlu0 %560
    %562 = vrot.lane.b32.xlu0 %v255, 112
    %v563 = vpop.permute.xlu0 %562
    %564 = vrot.lane.b32.xlu0 %v45, 112
    %v565 = vpop.permute.xlu0 %564
    %566 = vrot.lane.b32.xlu0 %v49, 112
    %v567 = vpop.permute.xlu0 %566
    %568 = vrot.lane.b32.xlu0 %v53, 112
    %v569 = vpop.permute.xlu0 %568
    %570 = vrot.lane.b32.xlu0 %v57, 112
    %v571 = vpop.permute.xlu0 %570
    %572 = vrot.lane.b32.xlu0 %v316, 112
    %v573 = vpop.permute.xlu0 %572
    %574 = vrot.lane.b32.xlu0 %v320, 112
    %v575 = vpop.permute.xlu0 %574
    %576 = vrot.lane.b32.xlu0 %v324, 112
    %v577 = vpop.permute.xlu0 %576
    %578 = vrot.lane.b32.xlu0 %v328, 112
    %v579 = vpop.permute.xlu0 %578
    %580 = vrot.lane.b32.xlu0 %v244, 112
    %v581 = vpop.permute.xlu0 %580
    %582 = vrot.lane.b32.xlu0 %v248, 112
    %v583 = vpop.permute.xlu0 %582
    %584 = vrot.lane.b32.xlu0 %v252, 112
    %v585 = vpop.permute.xlu0 %584
    %586 = vrot.lane.b32.xlu0 %v256, 112
    %v587 = vpop.permute.xlu0 %586
    %588 = vrot.lane.b32.xlu0 %v46, 112
    %v589 = vpop.permute.xlu0 %588
    %590 = vrot.lane.b32.xlu0 %v50, 112
    %v591 = vpop.permute.xlu0 %590
    %592 = vrot.lane.b32.xlu0 %v54, 112
    %v593 = vpop.permute.xlu0 %592
    %594 = vrot.lane.b32.xlu0 %v58, 112
    %v595 = vpop.permute.xlu0 %594
    %596 = vrot.lane.b32.xlu0 %v317, 112
    %v597 = vpop.permute.xlu0 %596
    %598 = vrot.lane.b32.xlu0 %v321, 112
    %v599 = vpop.permute.xlu0 %598
    %600 = vrot.lane.b32.xlu0 %v325, 112
    %v601 = vpop.permute.xlu0 %600
    %602 = vrot.lane.b32.xlu0 %v329, 112
    %v603 = vpop.permute.xlu0 %602
    %604 = vrot.lane.b32.xlu0 %v245, 112
    %v605 = vpop.permute.xlu0 %604
    %606 = vrot.lane.b32.xlu0 %v249, 112
    %v607 = vpop.permute.xlu0 %606
    %608 = vrot.lane.b32.xlu0 %v253, 112
    %v609 = vpop.permute.xlu0 %608
    %610 = vrot.lane.b32.xlu0 %v257, 112
    %v611 = vpop.permute.xlu0 %610
    %612 = vrot.lane.b32.xlu0 %v47, 112
    %v613 = vpop.permute.xlu0 %612
    %614 = vrot.lane.b32.xlu0 %v51, 112
    %v615 = vpop.permute.xlu0 %614
    %616 = vrot.lane.b32.xlu0 %v55, 112
    %v617 = vpop.permute.xlu0 %616
    %618 = vrot.lane.b32.xlu0 %v59, 112
    %v619 = vpop.permute.xlu0 %618
    %620 = vrot.lane.b32.xlu0 %v318, 112
    %v621 = vpop.permute.xlu0 %620
    %622 = vrot.lane.b32.xlu0 %v322, 112
    %v623 = vpop.permute.xlu0 %622
    %624 = vrot.lane.b32.xlu0 %v326, 112
    %v625 = vpop.permute.xlu0 %624
    %626 = vrot.lane.b32.xlu0 %v330, 112
    %v627 = vpop.permute.xlu0 %626
    %vm628 = vcmp.lt.s32.totalorder %v61, 112
    %v629 = vsel %vm628, %v581, %v605
    %v630 = vsel %vm628, %v583, %v607
    %v631 = vsel %vm628, %v585, %v609
    %v632 = vsel %vm628, %v587, %v611
    %v633 = vsel %vm628, %v589, %v613
    %v634 = vsel %vm628, %v591, %v615
    %v635 = vsel %vm628, %v593, %v617
    %v636 = vsel %vm628, %v595, %v619
    %v637 = vsel %vm628, %v597, %v621
    %v638 = vsel %vm628, %v599, %v623
    %v639 = vsel %vm628, %v601, %v625
    %v640 = vsel %vm628, %v603, %v627
    %v641 = vsel %vm628, %v557, %v581
    %v642 = vsel %vm628, %v559, %v583
    %v643 = vsel %vm628, %v561, %v585
    %v644 = vsel %vm628, %v563, %v587
    %v645 = vsel %vm628, %v565, %v589
    %v646 = vsel %vm628, %v567, %v591
    %v647 = vsel %vm628, %v569, %v593
    %v648 = vsel %vm628, %v571, %v595
    %v649 = vsel %vm628, %v573, %v597
    %v650 = vsel %vm628, %v575, %v599
    %v651 = vsel %vm628, %v577, %v601
    %v652 = vsel %vm628, %v579, %v603
    %v653 = vsel %vm628, %v533, %v557
    %v654 = vsel %vm628, %v535, %v559
    %v655 = vsel %vm628, %v537, %v561
    %v656 = vsel %vm628, %v539, %v563
    %v657 = vsel %vm628, %v541, %v565
    %v658 = vsel %vm628, %v543, %v567
    %v659 = vsel %vm628, %v545, %v569
    %v660 = vsel %vm628, %v547, %v571
    %v661 = vsel %vm628, %v549, %v573
    %v662 = vsel %vm628, %v551, %v575
    %v663 = vsel %vm628, %v553, %v577
    %v664 = vsel %vm628, %v555, %v579
    %v665 = vsel %vm628, %v605, %v533
    %v666 = vsel %vm628, %v607, %v535
    %v667 = vsel %vm628, %v609, %v537
    %v668 = vsel %vm628, %v611, %v539
    %v669 = vsel %vm628, %v613, %v541
    %v670 = vsel %vm628, %v615, %v543
    %v671 = vsel %vm628, %v617, %v545
    %v672 = vsel %vm628, %v619, %v547
    %v673 = vsel %vm628, %v621, %v549
    %v674 = vsel %vm628, %v623, %v551
    %v675 = vsel %vm628, %v625, %v553
    %v676 = vsel %vm628, %v627, %v555
    %v677 = vsel %vm173, 1, 0
    %v678 = vsel %vm174, 1, 0
    %v679 = vsel %vm175, 1, 0
    %v680 = vsel %vm176, 1, 0
    %vm681 = vcmp.eq.s32.totalorder %v677, 1
    %vm682 = vcmp.eq.s32.totalorder %v678, 1
    %vm683 = vcmp.eq.s32.totalorder %v679, 1
    %vm684 = vcmp.eq.s32.totalorder %v680, 1
    %v685 = vsel %vm681, %v653, 0.0
    %v686 = vsel %vm682, %v641, 0.0
    %v687 = vsel %vm683, %v629, 0.0
    %v688 = vsel %vm684, %v665, 0.0
    %v689 = vsel %vm681, %v654, 0.0
    %v690 = vsel %vm682, %v642, 0.0
    %v691 = vsel %vm683, %v630, 0.0
    %v692 = vsel %vm684, %v666, 0.0
    %v693 = vsel %vm681, %v655, 0.0
    %v694 = vsel %vm682, %v643, 0.0
    %v695 = vsel %vm683, %v631, 0.0
    %v696 = vsel %vm684, %v667, 0.0
    %v697 = vsel %vm681, %v656, 0.0
    %v698 = vsel %vm682, %v644, 0.0
    %v699 = vsel %vm683, %v632, 0.0
    %v700 = vsel %vm684, %v668, 0.0
    %v701 = vsel %vm681, %v657, 0.0
    %v702 = vsel %vm682, %v645, 0.0
    %v703 = vsel %vm683, %v633, 0.0
    %v704 = vsel %vm684, %v669, 0.0
    %v705 = vsel %vm681, %v658, 0.0
    %v706 = vsel %vm682, %v646, 0.0
    %v707 = vsel %vm683, %v634, 0.0
    %v708 = vsel %vm684, %v670, 0.0
    %v709 = vsel %vm681, %v659, 0.0
    %v710 = vsel %vm682, %v647, 0.0
    %v711 = vsel %vm683, %v635, 0.0
    %v712 = vsel %vm684, %v671, 0.0
    %v713 = vsel %vm681, %v660, 0.0
    %v714 = vsel %vm682, %v648, 0.0
    %v715 = vsel %vm683, %v636, 0.0
    %v716 = vsel %vm684, %v672, 0.0
    %v717 = vsel %vm681, %v661, 0.0
    %v718 = vsel %vm682, %v649, 0.0
    %v719 = vsel %vm683, %v637, 0.0
    %v720 = vsel %vm684, %v673, 0.0
    %v721 = vsel %vm681, %v662, 0.0
    %v722 = vsel %vm682, %v650, 0.0
    %v723 = vsel %vm683, %v638, 0.0
    %v724 = vsel %vm684, %v674, 0.0
    %v725 = vsel %vm681, %v663, 0.0
    %v726 = vsel %vm682, %v651, 0.0
    %v727 = vsel %vm683, %v639, 0.0
    %v728 = vsel %vm684, %v675, 0.0
    %v729 = vsel %vm681, %v664, 0.0
    %v730 = vsel %vm682, %v652, 0.0
    %v731 = vsel %vm683, %v640, 0.0
    %v732 = vsel %vm684, %v676, 0.0
    %v733 = vpack.c.bf16 %v488, %v484
    %v734 = vpack.c.bf16 %v489, %v485
    %v735 = vpack.c.bf16 %v490, %v486
    %v736 = vpack.c.bf16 %v491, %v487
    %v737 = vpack.c.bf16 %v496, %v492
    %v738 = vpack.c.bf16 %v497, %v493
    %v739 = vpack.c.bf16 %v498, %v494
    %v740 = vpack.c.bf16 %v499, %v495
    %v741 = vpack.c.bf16 %v504, %v500
    %v742 = vpack.c.bf16 %v505, %v501
    %v743 = vpack.c.bf16 %v506, %v502
    %v744 = vpack.c.bf16 %v507, %v503
    %v745 = vpack.c.bf16 %v512, %v508
    %v746 = vpack.c.bf16 %v513, %v509
    %v747 = vpack.c.bf16 %v514, %v510
    %v748 = vpack.c.bf16 %v515, %v511
    %v749 = vpack.c.bf16 %v520, %v516
    %v750 = vpack.c.bf16 %v521, %v517
    %v751 = vpack.c.bf16 %v522, %v518
    %v752 = vpack.c.bf16 %v523, %v519
    %v753 = vpack.c.bf16 %v528, %v524
    %v754 = vpack.c.bf16 %v529, %v525
    %v755 = vpack.c.bf16 %v530, %v526
    %v756 = vpack.c.bf16 %v531, %v527
    %v757 = vpack.c.bf16 %v246, %v242
    %v758 = vpack.c.bf16 %v247, %v243
    %v759 = vpack.c.bf16 %v248, %v244
    %v760 = vpack.c.bf16 %v249, %v245
    %v761 = vpack.c.bf16 %v254, %v250
    %v762 = vpack.c.bf16 %v255, %v251
    %v763 = vpack.c.bf16 %v256, %v252
    %v764 = vpack.c.bf16 %v257, %v253
    %v765 = vpack.c.bf16 %v48, %v44
    %v766 = vpack.c.bf16 %v49, %v45
    %v767 = vpack.c.bf16 %v50, %v46
    %v768 = vpack.c.bf16 %v51, %v47
    %v769 = vpack.c.bf16 %v56, %v52
    %v770 = vpack.c.bf16 %v57, %v53
    %v771 = vpack.c.bf16 %v58, %v54
    %v772 = vpack.c.bf16 %v59, %v55
    %v773 = vpack.c.bf16 %v319, %v315
    %v774 = vpack.c.bf16 %v320, %v316
    %v775 = vpack.c.bf16 %v321, %v317
    %v776 = vpack.c.bf16 %v322, %v318
    %v777 = vpack.c.bf16 %v327, %v323
    %v778 = vpack.c.bf16 %v328, %v324
    %v779 = vpack.c.bf16 %v329, %v325
    %v780 = vpack.c.bf16 %v330, %v326
    %v781 = vpack.c.bf16 %v689, %v685
    %v782 = vpack.c.bf16 %v690, %v686
    %v783 = vpack.c.bf16 %v691, %v687
    %v784 = vpack.c.bf16 %v692, %v688
    %v785 = vpack.c.bf16 %v697, %v693
    %v786 = vpack.c.bf16 %v698, %v694
    %v787 = vpack.c.bf16 %v699, %v695
    %v788 = vpack.c.bf16 %v700, %v696
    %v789 = vpack.c.bf16 %v705, %v701
    %v790 = vpack.c.bf16 %v706, %v702
    %v791 = vpack.c.bf16 %v707, %v703
    %v792 = vpack.c.bf16 %v708, %v704
    %v793 = vpack.c.bf16 %v713, %v709
    %v794 = vpack.c.bf16 %v714, %v710
    %v795 = vpack.c.bf16 %v715, %v711
    %v796 = vpack.c.bf16 %v716, %v712
    %v797 = vpack.c.bf16 %v721, %v717
    %v798 = vpack.c.bf16 %v722, %v718
    %v799 = vpack.c.bf16 %v723, %v719
    %v800 = vpack.c.bf16 %v724, %v720
    %v801 = vpack.c.bf16 %v729, %v725
    %v802 = vpack.c.bf16 %v730, %v726
    %v803 = vpack.c.bf16 %v731, %v727
    %v804 = vpack.c.bf16 %v732, %v728
    %v805 = vld [vmem:[%s2] sm:$0xff]
    %v806 = vld [vmem:[%s2 + $0x8] sm:$0xff]
    %v807 = vld [vmem:[%s2 + $0x10] sm:$0xff]
    %v808 = vld [vmem:[%s2 + $0x18] sm:$0xff]
    %810 = vset.pattern.permute.xlu0 0
    %811 = vperm.xlu0 %810, %v805
    %v812 = vpop.permute.xlu0 %811
    %815 = vset.pattern.permute.xlu0 0
    %816 = vperm.xlu0 %815, %v806
    %v817 = vpop.permute.xlu0 %816
    %820 = vset.pattern.permute.xlu0 0
    %821 = vperm.xlu0 %820, %v807
    %v822 = vpop.permute.xlu0 %821
    %825 = vset.pattern.permute.xlu0 0
    %826 = vperm.xlu0 %825, %v808
    %v827 = vpop.permute.xlu0 %826
    %v837 = vunpack.c.l.b16 %v177
    %v838 = vunpack.c.h.b16 %v177
    %v839 = vunpack.c.l.b16 %v178
    %v840 = vunpack.c.l.b16 %v179
    %v841 = vunpack.c.h.b16 %v179
    %v842 = vunpack.c.l.b16 %v180
    %v843 = vunpack.c.l.b16 %v181
    %v844 = vunpack.c.h.b16 %v181
    %v845 = vunpack.c.l.b16 %v182
    %v846 = vunpack.c.l.b16 %v183
    %v847 = vunpack.c.h.b16 %v183
    %v848 = vunpack.c.l.b16 %v184
    %v849 = vpack.c.b16 %v840, %v837
    %v850 = vpack.c.b16 %v841, %v838
    %v851 = vpack.c.b16 %v842, %v839
    %v852 = vpack.c.b16 %v846, %v843
    %v853 = vpack.c.b16 %v847, %v844
    %v854 = vpack.c.b16 %v848, %v845
    %vm859 = vcmask 261120
    %v861 = vsel %vm859, %v851, 0
    %v864 = vsel %vm859, %v854, 0
    %866 = vmatprep.subr.bf16.mxu0 %v762
    %867 = vmatpush1.bf16.msra.mxu0 %v761
    %868 = vmatprep.subr.bf16.mxu0 %v758
    %869 = vmatpush1.bf16.msra.mxu0 %v757
    %870 = vmatprep.subr.bf16.mxu0 %v754
    %871 = vmatpush1.bf16.msra.mxu0 %v753
    %872 = vmatprep.subr.bf16.mxu0 %v750
    %873 = vmatpush1.bf16.msra.mxu0 %v749
    %874 = vmatprep.subr.bf16.mxu0 %v746
    %875 = vmatpush1.bf16.msra.mxu0 %v745
    %876 = vmatprep.subr.bf16.mxu0 %v742
    %877 = vmatpush1.bf16.msra.mxu0 %v741
    %878 = vmatprep.subr.bf16.mxu0 %v738
    %879 = vmatpush1.bf16.msra.mxu0 %v737
    %880 = vmatprep.subr.bf16.mxu0 %v734
    %881 = vmatpush1.bf16.msra.mxu0 %v733
    %882 = vmatprep.subr.bf16.mxu0 %v794
    %883 = vmatpush2.bf16.msra.mxu0 %v793
    %884 = vmatprep.subr.bf16.mxu0 %v790
    %885 = vmatpush2.bf16.msra.mxu0 %v789
    %886 = vmatprep.subr.bf16.mxu0 %v786
    %887 = vmatpush2.bf16.msra.mxu0 %v785
    %888 = vmatprep.subr.bf16.mxu0 %v782
    %889 = vmatpush2.bf16.msra.mxu0 %v781
    %890 = vmatprep.subr.bf16.mxu0 %v778
    %891 = vmatpush2.bf16.msra.mxu0 %v777
    %892 = vmatprep.subr.bf16.mxu0 %v774
    %893 = vmatpush2.bf16.msra.mxu0 %v773
    %894 = vmatprep.subr.bf16.mxu0 %v770
    %895 = vmatpush2.bf16.msra.mxu0 %v769
    %896 = vmatprep.subr.bf16.mxu0 %v766
    %897 = vmatpush2.bf16.msra.mxu0 %v765
    %898 = vmatprep.mubr.bf16.mxu0 %v850
    %899 = vmatmul.mubr.bf16.gmra.mxu0 %v849
    %v900 = vpop.f32.mrf.mxu0
    %v901 = vadd.f32 %v812, %v900
    %v902 = vpop.f32.mrf.mxu0
    %v903 = vadd.f32 %v812, %v902
    %v904 = vpop.f32.mrf.mxu0
    %v905 = vadd.f32 %v817, %v904
    %v906 = vpop.f32.mrf.mxu0
    %v907 = vadd.f32 %v817, %v906
    %908 = vmatprep.mubr.bf16.mxu0 %v853
    %909 = vmatmul.mubr.bf16.gmra.mxu0 %v852
    %v910 = vpop.f32.mrf.mxu0
    %v911 = vadd.f32 %v822, %v910
    %v912 = vpop.f32.mrf.mxu0
    %v913 = vadd.f32 %v822, %v912
    %v914 = vpop.f32.mrf.mxu0
    %v915 = vadd.f32 %v827, %v914
    %v916 = vpop.f32.mrf.mxu0
    %v917 = vadd.f32 %v827, %v916
    %918 = vdwg.mxu0
    %919 = vmatprep.subr.bf16.mxu0 0
    %920 = vmatpush1.bf16.msra.mxu0 0
    %921 = vmatprep.subr.bf16.mxu0 0
    %922 = vmatpush1.bf16.msra.mxu0 0
    %923 = vmatprep.subr.bf16.mxu0 0
    %924 = vmatpush1.bf16.msra.mxu0 0
    %925 = vmatprep.subr.bf16.mxu0 0
    %926 = vmatpush1.bf16.msra.mxu0 0
    %927 = vmatprep.subr.bf16.mxu0 0
    %928 = vmatpush1.bf16.msra.mxu0 0
    %929 = vmatprep.subr.bf16.mxu0 0
    %930 = vmatpush1.bf16.msra.mxu0 0
    %931 = vmatprep.subr.bf16.mxu0 %v802
    %932 = vmatpush1.bf16.msra.mxu0 %v801
    %933 = vmatprep.subr.bf16.mxu0 %v798
    %934 = vmatpush1.bf16.msra.mxu0 %v797
    %935 = vmatprep.subr.bf16.mxu0 0
    %936 = vmatpush2.bf16.msra.mxu0 0
    %937 = vmatprep.subr.bf16.mxu0 0
    %938 = vmatpush2.bf16.msra.mxu0 0
    %939 = vmatprep.subr.bf16.mxu0 0
    %940 = vmatpush2.bf16.msra.mxu0 0
    %941 = vmatprep.subr.bf16.mxu0 0
    %942 = vmatpush2.bf16.msra.mxu0 0
    %943 = vmatprep.subr.bf16.mxu0 0
    %944 = vmatpush2.bf16.msra.mxu0 0
    %945 = vmatprep.subr.bf16.mxu0 0
    %946 = vmatpush2.bf16.msra.mxu0 0
    %947 = vmatprep.subr.bf16.mxu0 0
    %948 = vmatpush2.bf16.msra.mxu0 0
    %949 = vmatprep.subr.bf16.mxu0 0
    %950 = vmatpush2.bf16.msra.mxu0 0
    %951 = vmatprep.mubr.bf16.mxu0 0
    %952 = vmatmul.mubr.bf16.gmra.mxu0 %v861
    %v953 = vpop.f32.mrf.mxu0
    %v954 = vadd.f32 %v901, %v953
    %v955 = vpop.f32.mrf.mxu0
    %v956 = vadd.f32 %v903, %v955
    %v957 = vpop.f32.mrf.mxu0
    %v958 = vadd.f32 %v905, %v957
    %v959 = vpop.f32.mrf.mxu0
    %v960 = vadd.f32 %v907, %v959
    %961 = vmatprep.mubr.bf16.mxu0 0
    %962 = vmatmul.mubr.bf16.gmra.mxu0 %v864
    %v963 = vpop.f32.mrf.mxu0
    %v964 = vadd.f32 %v911, %v963
    %v965 = vpop.f32.mrf.mxu0
    %v966 = vadd.f32 %v913, %v965
    %v967 = vpop.f32.mrf.mxu0
    %v968 = vadd.f32 %v915, %v967
    %v969 = vpop.f32.mrf.mxu0
    %v970 = vadd.f32 %v917, %v969
    %971 = vdwg.mxu0
    %972 = vmatprep.subr.bf16.mxu0 %v764
    %973 = vmatpush1.bf16.msra.mxu0 %v763
    %974 = vmatprep.subr.bf16.mxu0 %v760
    %975 = vmatpush1.bf16.msra.mxu0 %v759
    %976 = vmatprep.subr.bf16.mxu0 %v756
    %977 = vmatpush1.bf16.msra.mxu0 %v755
    %978 = vmatprep.subr.bf16.mxu0 %v752
    %979 = vmatpush1.bf16.msra.mxu0 %v751
    %980 = vmatprep.subr.bf16.mxu0 %v748
    %981 = vmatpush1.bf16.msra.mxu0 %v747
    %982 = vmatprep.subr.bf16.mxu0 %v744
    %983 = vmatpush1.bf16.msra.mxu0 %v743
    %984 = vmatprep.subr.bf16.mxu0 %v740
    %985 = vmatpush1.bf16.msra.mxu0 %v739
    %986 = vmatprep.subr.bf16.mxu0 %v736
    %987 = vmatpush1.bf16.msra.mxu0 %v735
    %988 = vmatprep.subr.bf16.mxu0 %v796
    %989 = vmatpush2.bf16.msra.mxu0 %v795
    %990 = vmatprep.subr.bf16.mxu0 %v792
    %991 = vmatpush2.bf16.msra.mxu0 %v791
    %992 = vmatprep.subr.bf16.mxu0 %v788
    %993 = vmatpush2.bf16.msra.mxu0 %v787
    %994 = vmatprep.subr.bf16.mxu0 %v784
    %995 = vmatpush2.bf16.msra.mxu0 %v783
    %996 = vmatprep.subr.bf16.mxu0 %v780
    %997 = vmatpush2.bf16.msra.mxu0 %v779
    %998 = vmatprep.subr.bf16.mxu0 %v776
    %999 = vmatpush2.bf16.msra.mxu0 %v775
    %1000 = vmatprep.subr.bf16.mxu0 %v772
    %1001 = vmatpush2.bf16.msra.mxu0 %v771
    %1002 = vmatprep.subr.bf16.mxu0 %v768
    %1003 = vmatpush2.bf16.msra.mxu0 %v767
    %1004 = vmatprep.mubr.bf16.mxu0 %v850
    %1005 = vmatmul.mubr.bf16.gmra.mxu0 %v849
    %v1006 = vpop.f32.mrf.mxu0
    %v1007 = vadd.f32 %v812, %v1006
    %v1008 = vpop.f32.mrf.mxu0
    %v1009 = vadd.f32 %v812, %v1008
    %v1010 = vpop.f32.mrf.mxu0
    %v1011 = vadd.f32 %v817, %v1010
    %v1012 = vpop.f32.mrf.mxu0
    %v1013 = vadd.f32 %v817, %v1012
    %1014 = vmatprep.mubr.bf16.mxu0 %v853
    %1015 = vmatmul.mubr.bf16.gmra.mxu0 %v852
    %v1016 = vpop.f32.mrf.mxu0
    %v1017 = vadd.f32 %v822, %v1016
    %v1018 = vpop.f32.mrf.mxu0
    %v1019 = vadd.f32 %v822, %v1018
    %v1020 = vpop.f32.mrf.mxu0
    %v1021 = vadd.f32 %v827, %v1020
    %v1022 = vpop.f32.mrf.mxu0
    %v1023 = vadd.f32 %v827, %v1022
    %1024 = vdwg.mxu0
    %1025 = vmatprep.subr.bf16.mxu0 0
    %1026 = vmatpush1.bf16.msra.mxu0 0
    %1027 = vmatprep.subr.bf16.mxu0 0
    %1028 = vmatpush1.bf16.msra.mxu0 0
    %1029 = vmatprep.subr.bf16.mxu0 0
    %1030 = vmatpush1.bf16.msra.mxu0 0
    %1031 = vmatprep.subr.bf16.mxu0 0
    %1032 = vmatpush1.bf16.msra.mxu0 0
    %1033 = vmatprep.subr.bf16.mxu0 0
    %1034 = vmatpush1.bf16.msra.mxu0 0
    %1035 = vmatprep.subr.bf16.mxu0 0
    %1036 = vmatpush1.bf16.msra.mxu0 0
    %1037 = vmatprep.subr.bf16.mxu0 %v804
    %1038 = vmatpush1.bf16.msra.mxu0 %v803
    %1039 = vmatprep.subr.bf16.mxu0 %v800
    %1040 = vmatpush1.bf16.msra.mxu0 %v799
    %1041 = vmatprep.subr.bf16.mxu0 0
    %1042 = vmatpush2.bf16.msra.mxu0 0
    %1043 = vmatprep.subr.bf16.mxu0 0
    %1044 = vmatpush2.bf16.msra.mxu0 0
    %1045 = vmatprep.subr.bf16.mxu0 0
    %1046 = vmatpush2.bf16.msra.mxu0 0
    %1047 = vmatprep.subr.bf16.mxu0 0
    %1048 = vmatpush2.bf16.msra.mxu0 0
    %1049 = vmatprep.subr.bf16.mxu0 0
    %1050 = vmatpush2.bf16.msra.mxu0 0
    %1051 = vmatprep.subr.bf16.mxu0 0
    %1052 = vmatpush2.bf16.msra.mxu0 0
    %1053 = vmatprep.subr.bf16.mxu0 0
    %1054 = vmatpush2.bf16.msra.mxu0 0
    %1055 = vmatprep.subr.bf16.mxu0 0
    %1056 = vmatpush2.bf16.msra.mxu0 0
    %1057 = vmatprep.mubr.bf16.mxu0 0
    %1058 = vmatmul.mubr.bf16.gmra.mxu0 %v861
    %v1059 = vpop.f32.mrf.mxu0
    %v1060 = vadd.f32 %v1007, %v1059
    %v1061 = vpop.f32.mrf.mxu0
    %v1062 = vadd.f32 %v1009, %v1061
    %v1063 = vpop.f32.mrf.mxu0
    %v1064 = vadd.f32 %v1011, %v1063
    %v1065 = vpop.f32.mrf.mxu0
    %v1066 = vadd.f32 %v1013, %v1065
    %1067 = vmatprep.mubr.bf16.mxu0 0
    %1068 = vmatmul.mubr.bf16.gmra.mxu0 %v864
    %v1069 = vpop.f32.mrf.mxu0
    %v1070 = vadd.f32 %v1017, %v1069
    %v1071 = vpop.f32.mrf.mxu0
    %v1072 = vadd.f32 %v1019, %v1071
    %v1073 = vpop.f32.mrf.mxu0
    %v1074 = vadd.f32 %v1021, %v1073
    %v1075 = vpop.f32.mrf.mxu0
    %v1076 = vadd.f32 %v1023, %v1075
    %1077 = vdwg.mxu0
    %v1078 = vmax.f32 %v954, 0.0
    %v1079 = vmax.f32 %v956, 0.0
    %v1080 = vmax.f32 %v1060, 0.0
    %v1081 = vmax.f32 %v1062, 0.0
    %v1082 = vmax.f32 %v958, 0.0
    %v1083 = vmax.f32 %v960, 0.0
    %v1084 = vmax.f32 %v1064, 0.0
    %v1085 = vmax.f32 %v1066, 0.0
    %v1086 = vmax.f32 %v964, 0.0
    %v1087 = vmax.f32 %v966, 0.0
    %v1088 = vmax.f32 %v1070, 0.0
    %v1089 = vmax.f32 %v1072, 0.0
    %v1090 = vmax.f32 %v968, 0.0
    %v1091 = vmax.f32 %v970, 0.0
    %v1092 = vmax.f32 %v1074, 0.0
    %v1093 = vmax.f32 %v1076, 0.0
    %s1094 = scalar_lea.vmem [#allocation5], 48
    %v1095 = vld [vmem:[%s1094] sm:$0xff]
    %v1096 = vld [vmem:[%s1094 + $0x8] sm:$0xf]
    %v1097 = vld [vmem:[%s1094 + $0xc] sm:$0xff]
    %v1098 = vld [vmem:[%s1094 + $0x14] sm:$0xf]
    %v1099 = vld [vmem:[%s1094 + $0x18] sm:$0xff]
    %v1100 = vld [vmem:[%s1094 + $0x20] sm:$0xf]
    %v1101 = vld [vmem:[%s1094 + $0x24] sm:$0xff]
    %v1102 = vld [vmem:[%s1094 + $0x2c] sm:$0xf]
    %1103 = vrot.lane.b32.xlu0 %v1078, 1
    %v1104 = vpop.permute.xlu0 %1103
    %1105 = vrot.lane.b32.xlu0 %v1082, 1
    %v1106 = vpop.permute.xlu0 %1105
    %1107 = vrot.lane.b32.xlu0 %v1086, 1
    %v1108 = vpop.permute.xlu0 %1107
    %1109 = vrot.lane.b32.xlu0 %v1090, 1
    %v1110 = vpop.permute.xlu0 %1109
    %1111 = vrot.lane.b32.xlu0 %v1079, 1
    %v1112 = vpop.permute.xlu0 %1111
    %1113 = vrot.lane.b32.xlu0 %v1083, 1
    %v1114 = vpop.permute.xlu0 %1113
    %1115 = vrot.lane.b32.xlu0 %v1087, 1
    %v1116 = vpop.permute.xlu0 %1115
    %1117 = vrot.lane.b32.xlu0 %v1091, 1
    %v1118 = vpop.permute.xlu0 %1117
    %1119 = vrot.lane.b32.xlu0 %v1080, 1
    %v1120 = vpop.permute.xlu0 %1119
    %1121 = vrot.lane.b32.xlu0 %v1084, 1
    %v1122 = vpop.permute.xlu0 %1121
    %1123 = vrot.lane.b32.xlu0 %v1088, 1
    %v1124 = vpop.permute.xlu0 %1123
    %1125 = vrot.lane.b32.xlu0 %v1092, 1
    %v1126 = vpop.permute.xlu0 %1125
    %1127 = vrot.lane.b32.xlu0 %v1081, 1
    %v1128 = vpop.permute.xlu0 %1127
    %1129 = vrot.lane.b32.xlu0 %v1085, 1
    %v1130 = vpop.permute.xlu0 %1129
    %1131 = vrot.lane.b32.xlu0 %v1089, 1
    %v1132 = vpop.permute.xlu0 %1131
    %1133 = vrot.lane.b32.xlu0 %v1093, 1
    %v1134 = vpop.permute.xlu0 %1133
    %v1135 = vsel %vm217, %v1120, %v1128
    %v1136 = vsel %vm217, %v1122, %v1130
    %v1137 = vsel %vm217, %v1124, %v1132
    %v1138 = vsel %vm217, %v1126, %v1134
    %v1139 = vsel %vm217, %v1112, %v1120
    %v1140 = vsel %vm217, %v1114, %v1122
    %v1141 = vsel %vm217, %v1116, %v1124
    %v1142 = vsel %vm217, %v1118, %v1126
    %v1143 = vsel %vm217, %v1104, %v1112
    %v1144 = vsel %vm217, %v1106, %v1114
    %v1145 = vsel %vm217, %v1108, %v1116
    %v1146 = vsel %vm217, %v1110, %v1118
    %v1147 = vsel %vm217, %v1128, %v1104
    %v1148 = vsel %vm217, %v1130, %v1106
    %v1149 = vsel %vm217, %v1132, %v1108
    %v1150 = vsel %vm217, %v1134, %v1110
    %v1151 = vsel %vm238, %v1147, 0.0
    %v1152 = vsel %vm239, %v1143, 0.0
    %v1153 = vsel %vm240, %v1139, 0.0
    %v1154 = vsel %vm241, %v1135, 0.0
    %v1155 = vsel %vm238, %v1148, 0.0
    %v1156 = vsel %vm239, %v1144, 0.0
    %v1157 = vsel %vm240, %v1140, 0.0
    %v1158 = vsel %vm241, %v1136, 0.0
    %v1159 = vsel %vm238, %v1149, 0.0
    %v1160 = vsel %vm239, %v1145, 0.0
    %v1161 = vsel %vm240, %v1141, 0.0
    %v1162 = vsel %vm241, %v1137, 0.0
    %v1163 = vsel %vm238, %v1150, 0.0
    %v1164 = vsel %vm239, %v1146, 0.0
    %v1165 = vsel %vm240, %v1142, 0.0
    %v1166 = vsel %vm241, %v1138, 0.0
    %1167 = vrot.lane.b32.xlu0 %v1078, 127
    %v1168 = vpop.permute.xlu0 %1167
    %1169 = vrot.lane.b32.xlu0 %v1082, 127
    %v1170 = vpop.permute.xlu0 %1169
    %1171 = vrot.lane.b32.xlu0 %v1086, 127
    %v1172 = vpop.permute.xlu0 %1171
    %1173 = vrot.lane.b32.xlu0 %v1090, 127
    %v1174 = vpop.permute.xlu0 %1173
    %1175 = vrot.lane.b32.xlu0 %v1079, 127
    %v1176 = vpop.permute.xlu0 %1175
    %1177 = vrot.lane.b32.xlu0 %v1083, 127
    %v1178 = vpop.permute.xlu0 %1177
    %1179 = vrot.lane.b32.xlu0 %v1087, 127
    %v1180 = vpop.permute.xlu0 %1179
    %1181 = vrot.lane.b32.xlu0 %v1091, 127
    %v1182 = vpop.permute.xlu0 %1181
    %1183 = vrot.lane.b32.xlu0 %v1080, 127
    %v1184 = vpop.permute.xlu0 %1183
    %1185 = vrot.lane.b32.xlu0 %v1084, 127
    %v1186 = vpop.permute.xlu0 %1185
    %1187 = vrot.lane.b32.xlu0 %v1088, 127
    %v1188 = vpop.permute.xlu0 %1187
    %1189 = vrot.lane.b32.xlu0 %v1092, 127
    %v1190 = vpop.permute.xlu0 %1189
    %1191 = vrot.lane.b32.xlu0 %v1081, 127
    %v1192 = vpop.permute.xlu0 %1191
    %1193 = vrot.lane.b32.xlu0 %v1085, 127
    %v1194 = vpop.permute.xlu0 %1193
    %1195 = vrot.lane.b32.xlu0 %v1089, 127
    %v1196 = vpop.permute.xlu0 %1195
    %1197 = vrot.lane.b32.xlu0 %v1093, 127
    %v1198 = vpop.permute.xlu0 %1197
    %v1199 = vsel %vm290, %v1184, %v1192
    %v1200 = vsel %vm290, %v1186, %v1194
    %v1201 = vsel %vm290, %v1188, %v1196
    %v1202 = vsel %vm290, %v1190, %v1198
    %v1203 = vsel %vm290, %v1176, %v1184
    %v1204 = vsel %vm290, %v1178, %v1186
    %v1205 = vsel %vm290, %v1180, %v1188
    %v1206 = vsel %vm290, %v1182, %v1190
    %v1207 = vsel %vm290, %v1168, %v1176
    %v1208 = vsel %vm290, %v1170, %v1178
    %v1209 = vsel %vm290, %v1172, %v1180
    %v1210 = vsel %vm290, %v1174, %v1182
    %v1211 = vsel %vm290, %v1192, %v1168
    %v1212 = vsel %vm290, %v1194, %v1170
    %v1213 = vsel %vm290, %v1196, %v1172
    %v1214 = vsel %vm290, %v1198, %v1174
    %v1215 = vsel %vm311, %v1207, 0.0
    %v1216 = vsel %vm312, %v1203, 0.0
    %v1217 = vsel %vm313, %v1199, 0.0
    %v1218 = vsel %vm314, %v1211, 0.0
    %v1219 = vsel %vm311, %v1208, 0.0
    %v1220 = vsel %vm312, %v1204, 0.0
    %v1221 = vsel %vm313, %v1200, 0.0
    %v1222 = vsel %vm314, %v1212, 0.0
    %v1223 = vsel %vm311, %v1209, 0.0
    %v1224 = vsel %vm312, %v1205, 0.0
    %v1225 = vsel %vm313, %v1201, 0.0
    %v1226 = vsel %vm314, %v1213, 0.0
    %v1227 = vsel %vm311, %v1210, 0.0
    %v1228 = vsel %vm312, %v1206, 0.0
    %v1229 = vsel %vm313, %v1202, 0.0
    %v1230 = vsel %vm314, %v1214, 0.0
    %1231 = vrot.lane.b32.xlu0 %v1151, 16
    %v1232 = vpop.permute.xlu0 %1231
    %1233 = vrot.lane.b32.xlu0 %v1155, 16
    %v1234 = vpop.permute.xlu0 %1233
    %1235 = vrot.lane.b32.xlu0 %v1159, 16
    %v1236 = vpop.permute.xlu0 %1235
    %1237 = vrot.lane.b32.xlu0 %v1163, 16
    %v1238 = vpop.permute.xlu0 %1237
    %1239 = vrot.lane.b32.xlu0 %v1078, 16
    %v1240 = vpop.permute.xlu0 %1239
    %1241 = vrot.lane.b32.xlu0 %v1082, 16
    %v1242 = vpop.permute.xlu0 %1241
    %1243 = vrot.lane.b32.xlu0 %v1086, 16
    %v1244 = vpop.permute.xlu0 %1243
    %1245 = vrot.lane.b32.xlu0 %v1090, 16
    %v1246 = vpop.permute.xlu0 %1245
    %1247 = vrot.lane.b32.xlu0 %v1215, 16
    %v1248 = vpop.permute.xlu0 %1247
    %1249 = vrot.lane.b32.xlu0 %v1219, 16
    %v1250 = vpop.permute.xlu0 %1249
    %1251 = vrot.lane.b32.xlu0 %v1223, 16
    %v1252 = vpop.permute.xlu0 %1251
    %1253 = vrot.lane.b32.xlu0 %v1227, 16
    %v1254 = vpop.permute.xlu0 %1253
    %1255 = vrot.lane.b32.xlu0 %v1152, 16
    %v1256 = vpop.permute.xlu0 %1255
    %1257 = vrot.lane.b32.xlu0 %v1156, 16
    %v1258 = vpop.permute.xlu0 %1257
    %1259 = vrot.lane.b32.xlu0 %v1160, 16
    %v1260 = vpop.permute.xlu0 %1259
    %1261 = vrot.lane.b32.xlu0 %v1164, 16
    %v1262 = vpop.permute.xlu0 %1261
    %1263 = vrot.lane.b32.xlu0 %v1079, 16
    %v1264 = vpop.permute.xlu0 %1263
    %1265 = vrot.lane.b32.xlu0 %v1083, 16
    %v1266 = vpop.permute.xlu0 %1265
    %1267 = vrot.lane.b32.xlu0 %v1087, 16
    %v1268 = vpop.permute.xlu0 %1267
    %1269 = vrot.lane.b32.xlu0 %v1091, 16
    %v1270 = vpop.permute.xlu0 %1269
    %1271 = vrot.lane.b32.xlu0 %v1216, 16
    %v1272 = vpop.permute.xlu0 %1271
    %1273 = vrot.lane.b32.xlu0 %v1220, 16
    %v1274 = vpop.permute.xlu0 %1273
    %1275 = vrot.lane.b32.xlu0 %v1224, 16
    %v1276 = vpop.permute.xlu0 %1275
    %1277 = vrot.lane.b32.xlu0 %v1228, 16
    %v1278 = vpop.permute.xlu0 %1277
    %1279 = vrot.lane.b32.xlu0 %v1153, 16
    %v1280 = vpop.permute.xlu0 %1279
    %1281 = vrot.lane.b32.xlu0 %v1157, 16
    %v1282 = vpop.permute.xlu0 %1281
    %1283 = vrot.lane.b32.xlu0 %v1161, 16
    %v1284 = vpop.permute.xlu0 %1283
    %1285 = vrot.lane.b32.xlu0 %v1165, 16
    %v1286 = vpop.permute.xlu0 %1285
    %1287 = vrot.lane.b32.xlu0 %v1080, 16
    %v1288 = vpop.permute.xlu0 %1287
    %1289 = vrot.lane.b32.xlu0 %v1084, 16
    %v1290 = vpop.permute.xlu0 %1289
    %1291 = vrot.lane.b32.xlu0 %v1088, 16
    %v1292 = vpop.permute.xlu0 %1291
    %1293 = vrot.lane.b32.xlu0 %v1092, 16
    %v1294 = vpop.permute.xlu0 %1293
    %1295 = vrot.lane.b32.xlu0 %v1217, 16
    %v1296 = vpop.permute.xlu0 %1295
    %1297 = vrot.lane.b32.xlu0 %v1221, 16
    %v1298 = vpop.permute.xlu0 %1297
    %1299 = vrot.lane.b32.xlu0 %v1225, 16
    %v1300 = vpop.permute.xlu0 %1299
    %1301 = vrot.lane.b32.xlu0 %v1229, 16
    %v1302 = vpop.permute.xlu0 %1301
    %1303 = vrot.lane.b32.xlu0 %v1154, 16
    %v1304 = vpop.permute.xlu0 %1303
    %1305 = vrot.lane.b32.xlu0 %v1158, 16
    %v1306 = vpop.permute.xlu0 %1305
    %1307 = vrot.lane.b32.xlu0 %v1162, 16
    %v1308 = vpop.permute.xlu0 %1307
    %1309 = vrot.lane.b32.xlu0 %v1166, 16
    %v1310 = vpop.permute.xlu0 %1309
    %1311 = vrot.lane.b32.xlu0 %v1081, 16
    %v1312 = vpop.permute.xlu0 %1311
    %1313 = vrot.lane.b32.xlu0 %v1085, 16
    %v1314 = vpop.permute.xlu0 %1313
    %1315 = vrot.lane.b32.xlu0 %v1089, 16
    %v1316 = vpop.permute.xlu0 %1315
    %1317 = vrot.lane.b32.xlu0 %v1093, 16
    %v1318 = vpop.permute.xlu0 %1317
    %1319 = vrot.lane.b32.xlu0 %v1218, 16
    %v1320 = vpop.permute.xlu0 %1319
    %1321 = vrot.lane.b32.xlu0 %v1222, 16
    %v1322 = vpop.permute.xlu0 %1321
    %1323 = vrot.lane.b32.xlu0 %v1226, 16
    %v1324 = vpop.permute.xlu0 %1323
    %1325 = vrot.lane.b32.xlu0 %v1230, 16
    %v1326 = vpop.permute.xlu0 %1325
    %v1327 = vsel %vm427, %v1280, %v1304
    %v1328 = vsel %vm427, %v1282, %v1306
    %v1329 = vsel %vm427, %v1284, %v1308
    %v1330 = vsel %vm427, %v1286, %v1310
    %v1331 = vsel %vm427, %v1288, %v1312
    %v1332 = vsel %vm427, %v1290, %v1314
    %v1333 = vsel %vm427, %v1292, %v1316
    %v1334 = vsel %vm427, %v1294, %v1318
    %v1335 = vsel %vm427, %v1296, %v1320
    %v1336 = vsel %vm427, %v1298, %v1322
    %v1337 = vsel %vm427, %v1300, %v1324
    %v1338 = vsel %vm427, %v1302, %v1326
    %v1339 = vsel %vm427, %v1256, %v1280
    %v1340 = vsel %vm427, %v1258, %v1282
    %v1341 = vsel %vm427, %v1260, %v1284
    %v1342 = vsel %vm427, %v1262, %v1286
    %v1343 = vsel %vm427, %v1264, %v1288
    %v1344 = vsel %vm427, %v1266, %v1290
    %v1345 = vsel %vm427, %v1268, %v1292
    %v1346 = vsel %vm427, %v1270, %v1294
    %v1347 = vsel %vm427, %v1272, %v1296
    %v1348 = vsel %vm427, %v1274, %v1298
    %v1349 = vsel %vm427, %v1276, %v1300
    %v1350 = vsel %vm427, %v1278, %v1302
    %v1351 = vsel %vm427, %v1232, %v1256
    %v1352 = vsel %vm427, %v1234, %v1258
    %v1353 = vsel %vm427, %v1236, %v1260
    %v1354 = vsel %vm427, %v1238, %v1262
    %v1355 = vsel %vm427, %v1240, %v1264
    %v1356 = vsel %vm427, %v1242, %v1266
    %v1357 = vsel %vm427, %v1244, %v1268
    %v1358 = vsel %vm427, %v1246, %v1270
    %v1359 = vsel %vm427, %v1248, %v1272
    %v1360 = vsel %vm427, %v1250, %v1274
    %v1361 = vsel %vm427, %v1252, %v1276
    %v1362 = vsel %vm427, %v1254, %v1278
    %v1363 = vsel %vm427, %v1304, %v1232
    %v1364 = vsel %vm427, %v1306, %v1234
    %v1365 = vsel %vm427, %v1308, %v1236
    %v1366 = vsel %vm427, %v1310, %v1238
    %v1367 = vsel %vm427, %v1312, %v1240
    %v1368 = vsel %vm427, %v1314, %v1242
    %v1369 = vsel %vm427, %v1316, %v1244
    %v1370 = vsel %vm427, %v1318, %v1246
    %v1371 = vsel %vm427, %v1320, %v1248
    %v1372 = vsel %vm427, %v1322, %v1250
    %v1373 = vsel %vm427, %v1324, %v1252
    %v1374 = vsel %vm427, %v1326, %v1254
    %v1375 = vsel %vm480, %v1363, 0.0
    %v1376 = vsel %vm481, %v1351, 0.0
    %v1377 = vsel %vm482, %v1339, 0.0
    %v1378 = vsel %vm483, %v1327, 0.0
    %v1379 = vsel %vm480, %v1364, 0.0
    %v1380 = vsel %vm481, %v1352, 0.0
    %v1381 = vsel %vm482, %v1340, 0.0
    %v1382 = vsel %vm483, %v1328, 0.0
    %v1383 = vsel %vm480, %v1365, 0.0
    %v1384 = vsel %vm481, %v1353, 0.0
    %v1385 = vsel %vm482, %v1341, 0.0
    %v1386 = vsel %vm483, %v1329, 0.0
    %v1387 = vsel %vm480, %v1366, 0.0
    %v1388 = vsel %vm481, %v1354, 0.0
    %v1389 = vsel %vm482, %v1342, 0.0
    %v1390 = vsel %vm483, %v1330, 0.0
    %v1391 = vsel %vm480, %v1367, 0.0
    %v1392 = vsel %vm481, %v1355, 0.0
    %v1393 = vsel %vm482, %v1343, 0.0
    %v1394 = vsel %vm483, %v1331, 0.0
    %v1395 = vsel %vm480, %v1368, 0.0
    %v1396 = vsel %vm481, %v1356, 0.0
    %v1397 = vsel %vm482, %v1344, 0.0
    %v1398 = vsel %vm483, %v1332, 0.0
    %v1399 = vsel %vm480, %v1369, 0.0
    %v1400 = vsel %vm481, %v1357, 0.0
    %v1401 = vsel %vm482, %v1345, 0.0
    %v1402 = vsel %vm483, %v1333, 0.0
    %v1403 = vsel %vm480, %v1370, 0.0
    %v1404 = vsel %vm481, %v1358, 0.0
    %v1405 = vsel %vm482, %v1346, 0.0
    %v1406 = vsel %vm483, %v1334, 0.0
    %v1407 = vsel %vm480, %v1371, 0.0
    %v1408 = vsel %vm481, %v1359, 0.0
    %v1409 = vsel %vm482, %v1347, 0.0
    %v1410 = vsel %vm483, %v1335, 0.0
    %v1411 = vsel %vm480, %v1372, 0.0
    %v1412 = vsel %vm481, %v1360, 0.0
    %v1413 = vsel %vm482, %v1348, 0.0
    %v1414 = vsel %vm483, %v1336, 0.0
    %v1415 = vsel %vm480, %v1373, 0.0
    %v1416 = vsel %vm481, %v1361, 0.0
    %v1417 = vsel %vm482, %v1349, 0.0
    %v1418 = vsel %vm483, %v1337, 0.0
    %v1419 = vsel %vm480, %v1374, 0.0
    %v1420 = vsel %vm481, %v1362, 0.0
    %v1421 = vsel %vm482, %v1350, 0.0
    %v1422 = vsel %vm483, %v1338, 0.0
    %1423 = vrot.lane.b32.xlu0 %v1151, 112
    %v1424 = vpop.permute.xlu0 %1423
    %1425 = vrot.lane.b32.xlu0 %v1155, 112
    %v1426 = vpop.permute.xlu0 %1425
    %1427 = vrot.lane.b32.xlu0 %v1159, 112
    %v1428 = vpop.permute.xlu0 %1427
    %1429 = vrot.lane.b32.xlu0 %v1163, 112
    %v1430 = vpop.permute.xlu0 %1429
    %1431 = vrot.lane.b32.xlu0 %v1078, 112
    %v1432 = vpop.permute.xlu0 %1431
    %1433 = vrot.lane.b32.xlu0 %v1082, 112
    %v1434 = vpop.permute.xlu0 %1433
    %1435 = vrot.lane.b32.xlu0 %v1086, 112
    %v1436 = vpop.permute.xlu0 %1435
    %1437 = vrot.lane.b32.xlu0 %v1090, 112
    %v1438 = vpop.permute.xlu0 %1437
    %1439 = vrot.lane.b32.xlu0 %v1215, 112
    %v1440 = vpop.permute.xlu0 %1439
    %1441 = vrot.lane.b32.xlu0 %v1219, 112
    %v1442 = vpop.permute.xlu0 %1441
    %1443 = vrot.lane.b32.xlu0 %v1223, 112
    %v1444 = vpop.permute.xlu0 %1443
    %1445 = vrot.lane.b32.xlu0 %v1227, 112
    %v1446 = vpop.permute.xlu0 %1445
    %1447 = vrot.lane.b32.xlu0 %v1152, 112
    %v1448 = vpop.permute.xlu0 %1447
    %1449 = vrot.lane.b32.xlu0 %v1156, 112
    %v1450 = vpop.permute.xlu0 %1449
    %1451 = vrot.lane.b32.xlu0 %v1160, 112
    %v1452 = vpop.permute.xlu0 %1451
    %1453 = vrot.lane.b32.xlu0 %v1164, 112
    %v1454 = vpop.permute.xlu0 %1453
    %1455 = vrot.lane.b32.xlu0 %v1079, 112
    %v1456 = vpop.permute.xlu0 %1455
    %1457 = vrot.lane.b32.xlu0 %v1083, 112
    %v1458 = vpop.permute.xlu0 %1457
    %1459 = vrot.lane.b32.xlu0 %v1087, 112
    %v1460 = vpop.permute.xlu0 %1459
    %1461 = vrot.lane.b32.xlu0 %v1091, 112
    %v1462 = vpop.permute.xlu0 %1461
    %1463 = vrot.lane.b32.xlu0 %v1216, 112
    %v1464 = vpop.permute.xlu0 %1463
    %1465 = vrot.lane.b32.xlu0 %v1220, 112
    %v1466 = vpop.permute.xlu0 %1465
    %1467 = vrot.lane.b32.xlu0 %v1224, 112
    %v1468 = vpop.permute.xlu0 %1467
    %1469 = vrot.lane.b32.xlu0 %v1228, 112
    %v1470 = vpop.permute.xlu0 %1469
    %1471 = vrot.lane.b32.xlu0 %v1153, 112
    %v1472 = vpop.permute.xlu0 %1471
    %1473 = vrot.lane.b32.xlu0 %v1157, 112
    %v1474 = vpop.permute.xlu0 %1473
    %1475 = vrot.lane.b32.xlu0 %v1161, 112
    %v1476 = vpop.permute.xlu0 %1475
    %1477 = vrot.lane.b32.xlu0 %v1165, 112
    %v1478 = vpop.permute.xlu0 %1477
    %1479 = vrot.lane.b32.xlu0 %v1080, 112
    %v1480 = vpop.permute.xlu0 %1479
    %1481 = vrot.lane.b32.xlu0 %v1084, 112
    %v1482 = vpop.permute.xlu0 %1481
    %1483 = vrot.lane.b32.xlu0 %v1088, 112
    %v1484 = vpop.permute.xlu0 %1483
    %1485 = vrot.lane.b32.xlu0 %v1092, 112
    %v1486 = vpop.permute.xlu0 %1485
    %1487 = vrot.lane.b32.xlu0 %v1217, 112
    %v1488 = vpop.permute.xlu0 %1487
    %1489 = vrot.lane.b32.xlu0 %v1221, 112
    %v1490 = vpop.permute.xlu0 %1489
    %1491 = vrot.lane.b32.xlu0 %v1225, 112
    %v1492 = vpop.permute.xlu0 %1491
    %1493 = vrot.lane.b32.xlu0 %v1229, 112
    %v1494 = vpop.permute.xlu0 %1493
    %1495 = vrot.lane.b32.xlu0 %v1154, 112
    %v1496 = vpop.permute.xlu0 %1495
    %1497 = vrot.lane.b32.xlu0 %v1158, 112
    %v1498 = vpop.permute.xlu0 %1497
    %1499 = vrot.lane.b32.xlu0 %v1162, 112
    %v1500 = vpop.permute.xlu0 %1499
    %1501 = vrot.lane.b32.xlu0 %v1166, 112
    %v1502 = vpop.permute.xlu0 %1501
    %1503 = vrot.lane.b32.xlu0 %v1081, 112
    %v1504 = vpop.permute.xlu0 %1503
    %1505 = vrot.lane.b32.xlu0 %v1085, 112
    %v1506 = vpop.permute.xlu0 %1505
    %1507 = vrot.lane.b32.xlu0 %v1089, 112
    %v1508 = vpop.permute.xlu0 %1507
    %1509 = vrot.lane.b32.xlu0 %v1093, 112
    %v1510 = vpop.permute.xlu0 %1509
    %1511 = vrot.lane.b32.xlu0 %v1218, 112
    %v1512 = vpop.permute.xlu0 %1511
    %1513 = vrot.lane.b32.xlu0 %v1222, 112
    %v1514 = vpop.permute.xlu0 %1513
    %1515 = vrot.lane.b32.xlu0 %v1226, 112
    %v1516 = vpop.permute.xlu0 %1515
    %1517 = vrot.lane.b32.xlu0 %v1230, 112
    %v1518 = vpop.permute.xlu0 %1517
    %v1519 = vsel %vm628, %v1472, %v1496
    %v1520 = vsel %vm628, %v1474, %v1498
    %v1521 = vsel %vm628, %v1476, %v1500
    %v1522 = vsel %vm628, %v1478, %v1502
    %v1523 = vsel %vm628, %v1480, %v1504
    %v1524 = vsel %vm628, %v1482, %v1506
    %v1525 = vsel %vm628, %v1484, %v1508
    %v1526 = vsel %vm628, %v1486, %v1510
    %v1527 = vsel %vm628, %v1488, %v1512
    %v1528 = vsel %vm628, %v1490, %v1514
    %v1529 = vsel %vm628, %v1492, %v1516
    %v1530 = vsel %vm628, %v1494, %v1518
    %v1531 = vsel %vm628, %v1448, %v1472
    %v1532 = vsel %vm628, %v1450, %v1474
    %v1533 = vsel %vm628, %v1452, %v1476
    %v1534 = vsel %vm628, %v1454, %v1478
    %v1535 = vsel %vm628, %v1456, %v1480
    %v1536 = vsel %vm628, %v1458, %v1482
    %v1537 = vsel %vm628, %v1460, %v1484
    %v1538 = vsel %vm628, %v1462, %v1486
    %v1539 = vsel %vm628, %v1464, %v1488
    %v1540 = vsel %vm628, %v1466, %v1490
    %v1541 = vsel %vm628, %v1468, %v1492
    %v1542 = vsel %vm628, %v1470, %v1494
    %v1543 = vsel %vm628, %v1424, %v1448
    %v1544 = vsel %vm628, %v1426, %v1450
    %v1545 = vsel %vm628, %v1428, %v1452
    %v1546 = vsel %vm628, %v1430, %v1454
    %v1547 = vsel %vm628, %v1432, %v1456
    %v1548 = vsel %vm628, %v1434, %v1458
    %v1549 = vsel %vm628, %v1436, %v1460
    %v1550 = vsel %vm628, %v1438, %v1462
    %v1551 = vsel %vm628, %v1440, %v1464
    %v1552 = vsel %vm628, %v1442, %v1466
    %v1553 = vsel %vm628, %v1444, %v1468
    %v1554 = vsel %vm628, %v1446, %v1470
    %v1555 = vsel %vm628, %v1496, %v1424
    %v1556 = vsel %vm628, %v1498, %v1426
    %v1557 = vsel %vm628, %v1500, %v1428
    %v1558 = vsel %vm628, %v1502, %v1430
    %v1559 = vsel %vm628, %v1504, %v1432
    %v1560 = vsel %vm628, %v1506, %v1434
    %v1561 = vsel %vm628, %v1508, %v1436
    %v1562 = vsel %vm628, %v1510, %v1438
    %v1563 = vsel %vm628, %v1512, %v1440
    %v1564 = vsel %vm628, %v1514, %v1442
    %v1565 = vsel %vm628, %v1516, %v1444
    %v1566 = vsel %vm628, %v1518, %v1446
    %v1567 = vsel %vm681, %v1543, 0.0
    %v1568 = vsel %vm682, %v1531, 0.0
    %v1569 = vsel %vm683, %v1519, 0.0
    %v1570 = vsel %vm684, %v1555, 0.0
    %v1571 = vsel %vm681, %v1544, 0.0
    %v1572 = vsel %vm682, %v1532, 0.0
    %v1573 = vsel %vm683, %v1520, 0.0
    %v1574 = vsel %vm684, %v1556, 0.0
    %v1575 = vsel %vm681, %v1545, 0.0
    %v1576 = vsel %vm682, %v1533, 0.0
    %v1577 = vsel %vm683, %v1521, 0.0
    %v1578 = vsel %vm684, %v1557, 0.0
    %v1579 = vsel %vm681, %v1546, 0.0
    %v1580 = vsel %vm682, %v1534, 0.0
    %v1581 = vsel %vm683, %v1522, 0.0
    %v1582 = vsel %vm684, %v1558, 0.0
    %v1583 = vsel %vm681, %v1547, 0.0
    %v1584 = vsel %vm682, %v1535, 0.0
    %v1585 = vsel %vm683, %v1523, 0.0
    %v1586 = vsel %vm684, %v1559, 0.0
    %v1587 = vsel %vm681, %v1548, 0.0
    %v1588 = vsel %vm682, %v1536, 0.0
    %v1589 = vsel %vm683, %v1524, 0.0
    %v1590 = vsel %vm684, %v1560, 0.0
    %v1591 = vsel %vm681, %v1549, 0.0
    %v1592 = vsel %vm682, %v1537, 0.0
    %v1593 = vsel %vm683, %v1525, 0.0
    %v1594 = vsel %vm684, %v1561, 0.0
    %v1595 = vsel %vm681, %v1550, 0.0
    %v1596 = vsel %vm682, %v1538, 0.0
    %v1597 = vsel %vm683, %v1526, 0.0
    %v1598 = vsel %vm684, %v1562, 0.0
    %v1599 = vsel %vm681, %v1551, 0.0
    %v1600 = vsel %vm682, %v1539, 0.0
    %v1601 = vsel %vm683, %v1527, 0.0
    %v1602 = vsel %vm684, %v1563, 0.0
    %v1603 = vsel %vm681, %v1552, 0.0
    %v1604 = vsel %vm682, %v1540, 0.0
    %v1605 = vsel %vm683, %v1528, 0.0
    %v1606 = vsel %vm684, %v1564, 0.0
    %v1607 = vsel %vm681, %v1553, 0.0
    %v1608 = vsel %vm682, %v1541, 0.0
    %v1609 = vsel %vm683, %v1529, 0.0
    %v1610 = vsel %vm684, %v1565, 0.0
    %v1611 = vsel %vm681, %v1554, 0.0
    %v1612 = vsel %vm682, %v1542, 0.0
    %v1613 = vsel %vm683, %v1530, 0.0
    %v1614 = vsel %vm684, %v1566, 0.0
    %v1615 = vpack.c.bf16 %v1379, %v1375
    %v1616 = vpack.c.bf16 %v1380, %v1376
    %v1617 = vpack.c.bf16 %v1381, %v1377
    %v1618 = vpack.c.bf16 %v1382, %v1378
    %v1619 = vpack.c.bf16 %v1387, %v1383
    %v1620 = vpack.c.bf16 %v1388, %v1384
    %v1621 = vpack.c.bf16 %v1389, %v1385
    %v1622 = vpack.c.bf16 %v1390, %v1386
    %v1623 = vpack.c.bf16 %v1395, %v1391
    %v1624 = vpack.c.bf16 %v1396, %v1392
    %v1625 = vpack.c.bf16 %v1397, %v1393
    %v1626 = vpack.c.bf16 %v1398, %v1394
    %v1627 = vpack.c.bf16 %v1403, %v1399
    %v1628 = vpack.c.bf16 %v1404, %v1400
    %v1629 = vpack.c.bf16 %v1405, %v1401
    %v1630 = vpack.c.bf16 %v1406, %v1402
    %v1631 = vpack.c.bf16 %v1411, %v1407
    %v1632 = vpack.c.bf16 %v1412, %v1408
    %v1633 = vpack.c.bf16 %v1413, %v1409
    %v1634 = vpack.c.bf16 %v1414, %v1410
    %v1635 = vpack.c.bf16 %v1419, %v1415
    %v1636 = vpack.c.bf16 %v1420, %v1416
    %v1637 = vpack.c.bf16 %v1421, %v1417
    %v1638 = vpack.c.bf16 %v1422, %v1418
    %v1639 = vpack.c.bf16 %v1155, %v1151
    %v1640 = vpack.c.bf16 %v1156, %v1152
    %v1641 = vpack.c.bf16 %v1157, %v1153
    %v1642 = vpack.c.bf16 %v1158, %v1154
    %v1643 = vpack.c.bf16 %v1163, %v1159
    %v1644 = vpack.c.bf16 %v1164, %v1160
    %v1645 = vpack.c.bf16 %v1165, %v1161
    %v1646 = vpack.c.bf16 %v1166, %v1162
    %v1647 = vpack.c.bf16 %v1082, %v1078
    %v1648 = vpack.c.bf16 %v1083, %v1079
    %v1649 = vpack.c.bf16 %v1084, %v1080
    %v1650 = vpack.c.bf16 %v1085, %v1081
    %v1651 = vpack.c.bf16 %v1090, %v1086
    %v1652 = vpack.c.bf16 %v1091, %v1087
    %v1653 = vpack.c.bf16 %v1092, %v1088
    %v1654 = vpack.c.bf16 %v1093, %v1089
    %v1655 = vpack.c.bf16 %v1219, %v1215
    %v1656 = vpack.c.bf16 %v1220, %v1216
    %v1657 = vpack.c.bf16 %v1221, %v1217
    %v1658 = vpack.c.bf16 %v1222, %v1218
    %v1659 = vpack.c.bf16 %v1227, %v1223
    %v1660 = vpack.c.bf16 %v1228, %v1224
    %v1661 = vpack.c.bf16 %v1229, %v1225
    %v1662 = vpack.c.bf16 %v1230, %v1226
    %v1663 = vpack.c.bf16 %v1571, %v1567
    %v1664 = vpack.c.bf16 %v1572, %v1568
    %v1665 = vpack.c.bf16 %v1573, %v1569
    %v1666 = vpack.c.bf16 %v1574, %v1570
    %v1667 = vpack.c.bf16 %v1579, %v1575
    %v1668 = vpack.c.bf16 %v1580, %v1576
    %v1669 = vpack.c.bf16 %v1581, %v1577
    %v1670 = vpack.c.bf16 %v1582, %v1578
    %v1671 = vpack.c.bf16 %v1587, %v1583
    %v1672 = vpack.c.bf16 %v1588, %v1584
    %v1673 = vpack.c.bf16 %v1589, %v1585
    %v1674 = vpack.c.bf16 %v1590, %v1586
    %v1675 = vpack.c.bf16 %v1595, %v1591
    %v1676 = vpack.c.bf16 %v1596, %v1592
    %v1677 = vpack.c.bf16 %v1597, %v1593
    %v1678 = vpack.c.bf16 %v1598, %v1594
    %v1679 = vpack.c.bf16 %v1603, %v1599
    %v1680 = vpack.c.bf16 %v1604, %v1600
    %v1681 = vpack.c.bf16 %v1605, %v1601
    %v1682 = vpack.c.bf16 %v1606, %v1602
    %v1683 = vpack.c.bf16 %v1611, %v1607
    %v1684 = vpack.c.bf16 %v1612, %v1608
    %v1685 = vpack.c.bf16 %v1613, %v1609
    %v1686 = vpack.c.bf16 %v1614, %v1610
    %s1687 = scalar_lea.vmem %s2, 32
    %v1688 = vld [vmem:[%s1687] sm:$0xff]
    %v1689 = vld [vmem:[%s1687 + $0x8] sm:$0xff]
    %v1690 = vld [vmem:[%s1687 + $0x10] sm:$0xff]
    %v1691 = vld [vmem:[%s1687 + $0x18] sm:$0xff]
    %1693 = vset.pattern.permute.xlu0 0
    %1694 = vperm.xlu0 %1693, %v1688
    %v1695 = vpop.permute.xlu0 %1694
    %1698 = vset.pattern.permute.xlu0 0
    %1699 = vperm.xlu0 %1698, %v1689
    %v1700 = vpop.permute.xlu0 %1699
    %1703 = vset.pattern.permute.xlu0 0
    %1704 = vperm.xlu0 %1703, %v1690
    %v1705 = vpop.permute.xlu0 %1704
    %1708 = vset.pattern.permute.xlu0 0
    %1709 = vperm.xlu0 %1708, %v1691
    %v1710 = vpop.permute.xlu0 %1709
    %v1720 = vunpack.c.l.b16 %v1095
    %v1721 = vunpack.c.h.b16 %v1095
    %v1722 = vunpack.c.l.b16 %v1096
    %v1723 = vunpack.c.l.b16 %v1097
    %v1724 = vunpack.c.h.b16 %v1097
    %v1725 = vunpack.c.l.b16 %v1098
    %v1726 = vunpack.c.l.b16 %v1099
    %v1727 = vunpack.c.h.b16 %v1099
    %v1728 = vunpack.c.l.b16 %v1100
    %v1729 = vunpack.c.l.b16 %v1101
    %v1730 = vunpack.c.h.b16 %v1101
    %v1731 = vunpack.c.l.b16 %v1102
    %v1732 = vpack.c.b16 %v1723, %v1720
    %v1733 = vpack.c.b16 %v1724, %v1721
    %v1734 = vpack.c.b16 %v1725, %v1722
    %v1735 = vpack.c.b16 %v1729, %v1726
    %v1736 = vpack.c.b16 %v1730, %v1727
    %v1737 = vpack.c.b16 %v1731, %v1728
    %v1743 = vsel %vm859, %v1734, 0
    %v1746 = vsel %vm859, %v1737, 0
    %1748 = vmatprep.subr.bf16.mxu0 %v1644
    %1749 = vmatpush1.bf16.msra.mxu0 %v1643
    %1750 = vmatprep.subr.bf16.mxu0 %v1640
    %1751 = vmatpush1.bf16.msra.mxu0 %v1639
    %1752 = vmatprep.subr.bf16.mxu0 %v1636
    %1753 = vmatpush1.bf16.msra.mxu0 %v1635
    %1754 = vmatprep.subr.bf16.mxu0 %v1632
    %1755 = vmatpush1.bf16.msra.mxu0 %v1631
    %1756 = vmatprep.subr.bf16.mxu0 %v1628
    %1757 = vmatpush1.bf16.msra.mxu0 %v1627
    %1758 = vmatprep.subr.bf16.mxu0 %v1624
    %1759 = vmatpush1.bf16.msra.mxu0 %v1623
    %1760 = vmatprep.subr.bf16.mxu0 %v1620
    %1761 = vmatpush1.bf16.msra.mxu0 %v1619
    %1762 = vmatprep.subr.bf16.mxu0 %v1616
    %1763 = vmatpush1.bf16.msra.mxu0 %v1615
    %1764 = vmatprep.subr.bf16.mxu0 %v1676
    %1765 = vmatpush2.bf16.msra.mxu0 %v1675
    %1766 = vmatprep.subr.bf16.mxu0 %v1672
    %1767 = vmatpush2.bf16.msra.mxu0 %v1671
    %1768 = vmatprep.subr.bf16.mxu0 %v1668
    %1769 = vmatpush2.bf16.msra.mxu0 %v1667
    %1770 = vmatprep.subr.bf16.mxu0 %v1664
    %1771 = vmatpush2.bf16.msra.mxu0 %v1663
    %1772 = vmatprep.subr.bf16.mxu0 %v1660
    %1773 = vmatpush2.bf16.msra.mxu0 %v1659
    %1774 = vmatprep.subr.bf16.mxu0 %v1656
    %1775 = vmatpush2.bf16.msra.mxu0 %v1655
    %1776 = vmatprep.subr.bf16.mxu0 %v1652
    %1777 = vmatpush2.bf16.msra.mxu0 %v1651
    %1778 = vmatprep.subr.bf16.mxu0 %v1648
    %1779 = vmatpush2.bf16.msra.mxu0 %v1647
    %1780 = vmatprep.mubr.bf16.mxu0 %v1733
    %1781 = vmatmul.mubr.bf16.gmra.mxu0 %v1732
    %v1782 = vpop.f32.mrf.mxu0
    %v1783 = vadd.f32 %v1695, %v1782
    %v1784 = vpop.f32.mrf.mxu0
    %v1785 = vadd.f32 %v1695, %v1784
    %v1786 = vpop.f32.mrf.mxu0
    %v1787 = vadd.f32 %v1700, %v1786
    %v1788 = vpop.f32.mrf.mxu0
    %v1789 = vadd.f32 %v1700, %v1788
    %1790 = vmatprep.mubr.bf16.mxu0 %v1736
    %1791 = vmatmul.mubr.bf16.gmra.mxu0 %v1735
    %v1792 = vpop.f32.mrf.mxu0
    %v1793 = vadd.f32 %v1705, %v1792
    %v1794 = vpop.f32.mrf.mxu0
    %v1795 = vadd.f32 %v1705, %v1794
    %v1796 = vpop.f32.mrf.mxu0
    %v1797 = vadd.f32 %v1710, %v1796
    %v1798 = vpop.f32.mrf.mxu0
    %v1799 = vadd.f32 %v1710, %v1798
    %1800 = vdwg.mxu0
    %1801 = vmatprep.subr.bf16.mxu0 0
    %1802 = vmatpush1.bf16.msra.mxu0 0
    %1803 = vmatprep.subr.bf16.mxu0 0
    %1804 = vmatpush1.bf16.msra.mxu0 0
    %1805 = vmatprep.subr.bf16.mxu0 0
    %1806 = vmatpush1.bf16.msra.mxu0 0
    %1807 = vmatprep.subr.bf16.mxu0 0
    %1808 = vmatpush1.bf16.msra.mxu0 0
    %1809 = vmatprep.subr.bf16.mxu0 0
    %1810 = vmatpush1.bf16.msra.mxu0 0
    %1811 = vmatprep.subr.bf16.mxu0 0
    %1812 = vmatpush1.bf16.msra.mxu0 0
    %1813 = vmatprep.subr.bf16.mxu0 %v1684
    %1814 = vmatpush1.bf16.msra.mxu0 %v1683
    %1815 = vmatprep.subr.bf16.mxu0 %v1680
    %1816 = vmatpush1.bf16.msra.mxu0 %v1679
    %1817 = vmatprep.subr.bf16.mxu0 0
    %1818 = vmatpush2.bf16.msra.mxu0 0
    %1819 = vmatprep.subr.bf16.mxu0 0
    %1820 = vmatpush2.bf16.msra.mxu0 0
    %1821 = vmatprep.subr.bf16.mxu0 0
    %1822 = vmatpush2.bf16.msra.mxu0 0
    %1823 = vmatprep.subr.bf16.mxu0 0
    %1824 = vmatpush2.bf16.msra.mxu0 0
    %1825 = vmatprep.subr.bf16.mxu0 0
    %1826 = vmatpush2.bf16.msra.mxu0 0
    %1827 = vmatprep.subr.bf16.mxu0 0
    %1828 = vmatpush2.bf16.msra.mxu0 0
    %1829 = vmatprep.subr.bf16.mxu0 0
    %1830 = vmatpush2.bf16.msra.mxu0 0
    %1831 = vmatprep.subr.bf16.mxu0 0
    %1832 = vmatpush2.bf16.msra.mxu0 0
    %1833 = vmatprep.mubr.bf16.mxu0 0
    %1834 = vmatmul.mubr.bf16.gmra.mxu0 %v1743
    %v1835 = vpop.f32.mrf.mxu0
    %v1836 = vadd.f32 %v1783, %v1835
    %v1837 = vpop.f32.mrf.mxu0
    %v1838 = vadd.f32 %v1785, %v1837
    %v1839 = vpop.f32.mrf.mxu0
    %v1840 = vadd.f32 %v1787, %v1839
    %v1841 = vpop.f32.mrf.mxu0
    %v1842 = vadd.f32 %v1789, %v1841
    %1843 = vmatprep.mubr.bf16.mxu0 0
    %1844 = vmatmul.mubr.bf16.gmra.mxu0 %v1746
    %v1845 = vpop.f32.mrf.mxu0
    %v1846 = vadd.f32 %v1793, %v1845
    %v1847 = vpop.f32.mrf.mxu0
    %v1848 = vadd.f32 %v1795, %v1847
    %v1849 = vpop.f32.mrf.mxu0
    %v1850 = vadd.f32 %v1797, %v1849
    %v1851 = vpop.f32.mrf.mxu0
    %v1852 = vadd.f32 %v1799, %v1851
    %1853 = vdwg.mxu0
    %1854 = vmatprep.subr.bf16.mxu0 %v1646
    %1855 = vmatpush1.bf16.msra.mxu0 %v1645
    %1856 = vmatprep.subr.bf16.mxu0 %v1642
    %1857 = vmatpush1.bf16.msra.mxu0 %v1641
    %1858 = vmatprep.subr.bf16.mxu0 %v1638
    %1859 = vmatpush1.bf16.msra.mxu0 %v1637
    %1860 = vmatprep.subr.bf16.mxu0 %v1634
    %1861 = vmatpush1.bf16.msra.mxu0 %v1633
    %1862 = vmatprep.subr.bf16.mxu0 %v1630
    %1863 = vmatpush1.bf16.msra.mxu0 %v1629
    %1864 = vmatprep.subr.bf16.mxu0 %v1626
    %1865 = vmatpush1.bf16.msra.mxu0 %v1625
    %1866 = vmatprep.subr.bf16.mxu0 %v1622
    %1867 = vmatpush1.bf16.msra.mxu0 %v1621
    %1868 = vmatprep.subr.bf16.mxu0 %v1618
    %1869 = vmatpush1.bf16.msra.mxu0 %v1617
    %1870 = vmatprep.subr.bf16.mxu0 %v1678
    %1871 = vmatpush2.bf16.msra.mxu0 %v1677
    %1872 = vmatprep.subr.bf16.mxu0 %v1674
    %1873 = vmatpush2.bf16.msra.mxu0 %v1673
    %1874 = vmatprep.subr.bf16.mxu0 %v1670
    %1875 = vmatpush2.bf16.msra.mxu0 %v1669
    %1876 = vmatprep.subr.bf16.mxu0 %v1666
    %1877 = vmatpush2.bf16.msra.mxu0 %v1665
    %1878 = vmatprep.subr.bf16.mxu0 %v1662
    %1879 = vmatpush2.bf16.msra.mxu0 %v1661
    %1880 = vmatprep.subr.bf16.mxu0 %v1658
    %1881 = vmatpush2.bf16.msra.mxu0 %v1657
    %1882 = vmatprep.subr.bf16.mxu0 %v1654
    %1883 = vmatpush2.bf16.msra.mxu0 %v1653
    %1884 = vmatprep.subr.bf16.mxu0 %v1650
    %1885 = vmatpush2.bf16.msra.mxu0 %v1649
    %1886 = vmatprep.mubr.bf16.mxu0 %v1733
    %1887 = vmatmul.mubr.bf16.gmra.mxu0 %v1732
    %v1888 = vpop.f32.mrf.mxu0
    %v1889 = vadd.f32 %v1695, %v1888
    %v1890 = vpop.f32.mrf.mxu0
    %v1891 = vadd.f32 %v1695, %v1890
    %v1892 = vpop.f32.mrf.mxu0
    %v1893 = vadd.f32 %v1700, %v1892
    %v1894 = vpop.f32.mrf.mxu0
    %v1895 = vadd.f32 %v1700, %v1894
    %1896 = vmatprep.mubr.bf16.mxu0 %v1736
    %1897 = vmatmul.mubr.bf16.gmra.mxu0 %v1735
    %v1898 = vpop.f32.mrf.mxu0
    %v1899 = vadd.f32 %v1705, %v1898
    %v1900 = vpop.f32.mrf.mxu0
    %v1901 = vadd.f32 %v1705, %v1900
    %v1902 = vpop.f32.mrf.mxu0
    %v1903 = vadd.f32 %v1710, %v1902
    %v1904 = vpop.f32.mrf.mxu0
    %v1905 = vadd.f32 %v1710, %v1904
    %1906 = vdwg.mxu0
    %1907 = vmatprep.subr.bf16.mxu0 0
    %1908 = vmatpush1.bf16.msra.mxu0 0
    %1909 = vmatprep.subr.bf16.mxu0 0
    %1910 = vmatpush1.bf16.msra.mxu0 0
    %1911 = vmatprep.subr.bf16.mxu0 0
    %1912 = vmatpush1.bf16.msra.mxu0 0
    %1913 = vmatprep.subr.bf16.mxu0 0
    %1914 = vmatpush1.bf16.msra.mxu0 0
    %1915 = vmatprep.subr.bf16.mxu0 0
    %1916 = vmatpush1.bf16.msra.mxu0 0
    %1917 = vmatprep.subr.bf16.mxu0 0
    %1918 = vmatpush1.bf16.msra.mxu0 0
    %1919 = vmatprep.subr.bf16.mxu0 %v1686
    %1920 = vmatpush1.bf16.msra.mxu0 %v1685
    %1921 = vmatprep.subr.bf16.mxu0 %v1682
    %1922 = vmatpush1.bf16.msra.mxu0 %v1681
    %1923 = vmatprep.subr.bf16.mxu0 0
    %1924 = vmatpush2.bf16.msra.mxu0 0
    %1925 = vmatprep.subr.bf16.mxu0 0
    %1926 = vmatpush2.bf16.msra.mxu0 0
    %1927 = vmatprep.subr.bf16.mxu0 0
    %1928 = vmatpush2.bf16.msra.mxu0 0
    %1929 = vmatprep.subr.bf16.mxu0 0
    %1930 = vmatpush2.bf16.msra.mxu0 0
    %1931 = vmatprep.subr.bf16.mxu0 0
    %1932 = vmatpush2.bf16.msra.mxu0 0
    %1933 = vmatprep.subr.bf16.mxu0 0
    %1934 = vmatpush2.bf16.msra.mxu0 0
    %1935 = vmatprep.subr.bf16.mxu0 0
    %1936 = vmatpush2.bf16.msra.mxu0 0
    %1937 = vmatprep.subr.bf16.mxu0 0
    %1938 = vmatpush2.bf16.msra.mxu0 0
    %1939 = vmatprep.mubr.bf16.mxu0 0
    %1940 = vmatmul.mubr.bf16.gmra.mxu0 %v1743
    %v1941 = vpop.f32.mrf.mxu0
    %v1942 = vadd.f32 %v1889, %v1941
    %v1943 = vpop.f32.mrf.mxu0
    %v1944 = vadd.f32 %v1891, %v1943
    %v1945 = vpop.f32.mrf.mxu0
    %v1946 = vadd.f32 %v1893, %v1945
    %v1947 = vpop.f32.mrf.mxu0
    %v1948 = vadd.f32 %v1895, %v1947
    %1949 = vmatprep.mubr.bf16.mxu0 0
    %1950 = vmatmul.mubr.bf16.gmra.mxu0 %v1746
    %v1951 = vpop.f32.mrf.mxu0
    %v1952 = vadd.f32 %v1899, %v1951
    %v1953 = vpop.f32.mrf.mxu0
    %v1954 = vadd.f32 %v1901, %v1953
    %v1955 = vpop.f32.mrf.mxu0
    %v1956 = vadd.f32 %v1903, %v1955
    %v1957 = vpop.f32.mrf.mxu0
    %v1958 = vadd.f32 %v1905, %v1957
    %1959 = vdwg.mxu0
    %v1960 = vadd.f32 %v1836, %v44
    %v1961 = vadd.f32 %v1838, %v45
    %v1962 = vadd.f32 %v1942, %v46
    %v1963 = vadd.f32 %v1944, %v47
    %v1964 = vadd.f32 %v1840, %v48
    %v1965 = vadd.f32 %v1842, %v49
    %v1966 = vadd.f32 %v1946, %v50
    %v1967 = vadd.f32 %v1948, %v51
    %v1968 = vadd.f32 %v1846, %v52
    %v1969 = vadd.f32 %v1848, %v53
    %v1970 = vadd.f32 %v1952, %v54
    %v1971 = vadd.f32 %v1954, %v55
    %v1972 = vadd.f32 %v1850, %v56
    %v1973 = vadd.f32 %v1852, %v57
    %v1974 = vadd.f32 %v1956, %v58
    %v1975 = vadd.f32 %v1958, %v59
    %v1976 = vmax.f32 %v1960, 0.0
    %v1977 = vmax.f32 %v1961, 0.0
    %v1978 = vmax.f32 %v1962, 0.0
    %v1979 = vmax.f32 %v1963, 0.0
    %v1980 = vmax.f32 %v1964, 0.0
    %v1981 = vmax.f32 %v1965, 0.0
    %v1982 = vmax.f32 %v1966, 0.0
    %v1983 = vmax.f32 %v1967, 0.0
    %v1984 = vmax.f32 %v1968, 0.0
    %v1985 = vmax.f32 %v1969, 0.0
    %v1986 = vmax.f32 %v1970, 0.0
    %v1987 = vmax.f32 %v1971, 0.0
    %v1988 = vmax.f32 %v1972, 0.0
    %v1989 = vmax.f32 %v1973, 0.0
    %v1990 = vmax.f32 %v1974, 0.0
    %v1991 = vmax.f32 %v1975, 0.0
    %1992 = vst [vmem:[#allocation7] sm:$0xff] %v1976
    %1993 = vst [vmem:[#allocation7 + $0x8] sm:$0xff] %v1977
    %1994 = vst [vmem:[#allocation7 + $0x10] sm:$0xff] %v1978
    %1995 = vst [vmem:[#allocation7 + $0x18] sm:$0xff] %v1979
    %1996 = vst [vmem:[#allocation7 + $0x20] sm:$0xff] %v1980
    %1997 = vst [vmem:[#allocation7 + $0x28] sm:$0xff] %v1981
    %1998 = vst [vmem:[#allocation7 + $0x30] sm:$0xff] %v1982
    %1999 = vst [vmem:[#allocation7 + $0x38] sm:$0xff] %v1983
    %2000 = vst [vmem:[#allocation7 + $0x40] sm:$0xff] %v1984
    %2001 = vst [vmem:[#allocation7 + $0x48] sm:$0xff] %v1985
    %2002 = vst [vmem:[#allocation7 + $0x50] sm:$0xff] %v1986
    %2003 = vst [vmem:[#allocation7 + $0x58] sm:$0xff] %v1987
    %2004 = vst [vmem:[#allocation7 + $0x60] sm:$0xff] %v1988
    %2005 = vst [vmem:[#allocation7 + $0x68] sm:$0xff] %v1989
    %2006 = vst [vmem:[#allocation7 + $0x70] sm:$0xff] %v1990
    %2007 = vst [vmem:[#allocation7 + $0x78] sm:$0xff] %v1991
    // Predicated region
    $region22: #{tpu_custom_call.1} parent=1 // pred_check
      _
    $region23: #{tpu_custom_call.1} parent=1 // pred_check_branch
      %2009 = sbr.rel (0) target = $region25
    $region24: #{tpu_custom_call.1} parent=1 // pred_region
      %s2011 = ssub.s32 2048, 2048
      %2012 = vsyncadd [#allocation4], %s2011
      %s2013 = sshll.u32 [#allocation7], 4
      %s2014 = int_to_ptr.vmem [resolvable:$true] %s2013
      %2019 = dma.vmem_to_hbm [thread:$0]  %s2014, 2048, %s3, [#allocation4], 512, 512, 32
    $region25: #{tpu_custom_call.1} parent=1 // pred_fallthru
      _
    // Predicated region
    $region26: #{tpu_custom_call.1} parent=1 // pred_check
      _
    $region27: #{tpu_custom_call.1} parent=1 // pred_check_branch
      %2021 = sbr.rel (0) target = $region29
    $region28: #{tpu_custom_call.1} parent=1 // pred_region
      %2022 = dma.done [#allocation4], 2048
    $region29: #{tpu_custom_call.1} parent=1 // pred_fallthru
      _
    %2023 = vsyncpa [#allocation3], 1
    %2024 = vsyncpa [#allocation6], 1
    %2025 = vsyncpa [#allocation4], 1

</llo_original>
